<compile_context>
chip_gen: v7x
topology: tpu7x:2x2x1
jax: 0.10.0
libtpu: 0.0.40
codegen_flags: <defaults>
</compile_context>

<pallas_src>
import functools
import math

import jax
import jax.numpy as jnp
from jax.experimental import pallas as pl
from jax.experimental.pallas import tpu as pltpu

_EPS = 1e-5  # torch.nn.LayerNorm default eps


def _round_up(x, m):
    return ((x + m - 1) // m) * m


def _vmem_capacity_bytes():
    try:
        info = pltpu.get_tpu_info()
        cap = getattr(info, "vmem_capacity_bytes", None)
        if cap:
            return int(cap)
    except Exception:
        pass
    return 64 * 1024 * 1024  # conservative fallback: v7x per-TC VMEM


_VMEM_CAP = _vmem_capacity_bytes()
# 128-MiB parts (v5e/v6e): allow ~100 MiB so a full (h,h) bf16 weight double-buffers.
# 64-MiB parts (v7x): cap at ~56 MiB; the mlp chain then falls back to K-tiled weights.
_VMEM_LIMIT = int(min(100 << 20, _VMEM_CAP - (8 << 20)))


def _gelu(x):
    # Exact (erf-based) GELU, matching torch.nn.GELU() default.
    # TODO(synk): tanh-approx GELU would use the otherwise-idle EUP slot.
    return 0.5 * x * (1.0 + jax.lax.erf(x * (1.0 / math.sqrt(2.0))))


def _layernorm(y, g, b):
    mu = jnp.mean(y, axis=-1, keepdims=True)
    var = jnp.mean(jnp.square(y - mu), axis=-1, keepdims=True)
    return (y - mu) * jax.lax.rsqrt(var + _EPS) * g + b


def _mxu_dot(x_f32, w_bf16):
    # bf16 MXU matmul with f32 accumulation.
    return jnp.dot(x_f32.astype(jnp.bfloat16), w_bf16,
                   preferred_element_type=jnp.float32)


# ------------------------------ tile selection -------------------------------

def _pick_tile(dim, target):
    """Largest tile <= target that divides dim (falls back to the full dim)."""
    t = min(target, dim)
    while t > 128 and dim % t != 0:
        t -= 128
    return t if dim % t == 0 else dim


def _choose_mlp_tile(Bp, h):
    """None => stream a full (h, h) weight per block; else a K-tile size dividing h."""
    resident = 3 * Bp * h * 4 + 16 * h * 4          # out carry + acc + x + param rows
    budget = max(_VMEM_LIMIT - resident - (8 << 20), 8 << 20)
    cands = [t for t in range(h, 255, -128) if h % t == 0 and t % 128 == 0]
    for t in cands:
        if 2 * t * h * 2 <= budget:                 # double-buffered bf16 weight tile
            return None if t == h else t
    return cands[-1] if cands else None


# ------------------------------ Pallas kernels ------------------------------

def lin0_kernel(x_ref, w_ref, b_ref, g_ref, beta_ref, o_ref, *, tk):
    # lin0: Linear(in_dim, h) -> LayerNorm -> GELU, K-tiled over in_dim.
    # x is VMEM-resident (one block); the f32 accumulator IS the resident output block.
    k = pl.program_id(0)

    @pl.when(k == 0)
    def _():
        o_ref[...] = jnp.zeros_like(o_ref)

    start = pl.multiple_of(k * tk, tk)
    o_ref[...] += _mxu_dot(x_ref[:, pl.ds(start, tk)], w_ref[...])

    @pl.when(k == pl.num_programs(0) - 1)
    def _():
        y = o_ref[...] + b_ref[...]
        o_ref[...] = _gelu(_layernorm(y, g_ref[...], beta_ref[...]))


def mlp_full_kernel(x_ref, w_ref, b_ref, g_ref, beta_ref, o_ref):
    # Fused residual chain, one full (h, h) weight per grid step:
    #   x = GELU(LN(x @ W_b + b_b)) + x
    # The resident output block is the activation carry across blocks.
    @pl.when(pl.program_id(0) == 0)
    def _():
        o_ref[...] = x_ref[...]

    y = _mxu_dot(o_ref[...], w_ref[...]) + b_ref[...]
    o_ref[...] = _gelu(_layernorm(y, g_ref[...], beta_ref[...])) + o_ref[...]


def mlp_tiled_kernel(x_ref, w_ref, b_ref, g_ref, beta_ref, o_ref, acc_ref, *, tk):
    # Same chain, K-tiled weights (grid = (n_blocks, K_tiles)) for small-VMEM parts.
    blk = pl.program_id(0)
    k = pl.program_id(1)
    nk = pl.num_programs(1)

    @pl.when(jnp.logical_and(blk == 0, k == 0))
    def _():
        o_ref[...] = x_ref[...]            # load block input once

    @pl.when(k == 0)
    def _():
        acc_ref[...] = jnp.zeros_like(acc_ref)

    start = pl.multiple_of(k * tk, tk)
    acc_ref[...] += _mxu_dot(o_ref[:, pl.ds(start, tk)], w_ref[...])

    @pl.when(k == nk - 1)
    def _():
        y = acc_ref[...] + b_ref[...]
        o_ref[...] = _gelu(_layernorm(y, g_ref[...], beta_ref[...])) + o_ref[...]


def lin1_kernel(x_ref, w_ref, b_ref, o_ref, *, tk):
    # lin1: Linear(h, out_dim), K-tiled so the weight streams under compute.
    k = pl.program_id(0)

    @pl.when(k == 0)
    def _():
        o_ref[...] = jnp.zeros_like(o_ref)

    start = pl.multiple_of(k * tk, tk)
    o_ref[...] += _mxu_dot(x_ref[:, pl.ds(start, tk)], w_ref[...])

    @pl.when(k == pl.num_programs(0) - 1)
    def _():
        o_ref[...] += b_ref[...]


def projector_kernel(z_ref, g0_ref, bt0_ref, w0_ref, b0_ref,
                     g1_ref, bt1_ref, w1_ref, b1_ref,
                     g2_ref, bt2_ref, w2_ref, b2_ref, p_ref):
    # Projector: 3x (LayerNorm -> GELU -> Linear), all weights VMEM-resident.
    # Input is already reshaped to (B*tokens, clip_size) in the wrapper.
    # TODO(synk): remaining ~14 MiB of projector-weight DMA could be hidden via a
    #             cross-call prefetch started during the mlp chain.
    z = _gelu(_layernorm(z_ref[...], g0_ref[...], bt0_ref[...]))
    z = _mxu_dot(z, w0_ref[...]) + b0_ref[...]
    z = _gelu(_layernorm(z, g1_ref[...], bt1_ref[...]))
    z = _mxu_dot(z, w1_ref[...]) + b1_ref[...]
    z = _gelu(_layernorm(z, g2_ref[...], bt2_ref[...]))
    p_ref[...] = _mxu_dot(z, w2_ref[...]) + b2_ref[...]


# ------------------------------ pallas_call glue -----------------------------

def _lin0(x, w, b, g, beta, *, tk):
    Bp, Kp = x.shape
    h = w.shape[1]
    nk = Kp // tk
    kernel = functools.partial(lin0_kernel, tk=tk)
    return pl.pallas_call(
        kernel,
        out_shape=jax.ShapeDtypeStruct((Bp, h), jnp.float32),
        grid_spec=pltpu.PrefetchScalarGridSpec(
            num_scalar_prefetch=0,
            grid=(nk,),
            in_specs=[
                pl.BlockSpec((Bp, Kp), lambda k: (0, 0)),   # x: resident, sliced in-kernel
                pl.BlockSpec((tk, h), lambda k: (k, 0)),    # weight: streams (bf16)
                pl.BlockSpec((1, h), lambda k: (0, 0)),
                pl.BlockSpec((1, h), lambda k: (0, 0)),
                pl.BlockSpec((1, h), lambda k: (0, 0)),
            ],
            out_specs=pl.BlockSpec((Bp, h), lambda k: (0, 0)),
        ),
        compiler_params=pltpu.CompilerParams(
            dimension_semantics=("arbitrary",),
            vmem_limit_bytes=_VMEM_LIMIT,
        ),
    )(x, w, b, g, beta)


def _mlp_chain(x, w_stack, b_stack, g_stack, beta_stack, *, tk):
    Bp, h = x.shape
    nb = w_stack.shape[0]
    if tk is None:
        # Full (h, h) weight per block: 1 grid step per block, maximal DMA size.
        grid_spec = pltpu.PrefetchScalarGridSpec(
            num_scalar_prefetch=0,
            grid=(nb,),
            in_specs=[
                pl.BlockSpec((Bp, h), lambda b: (0, 0)),
                pl.BlockSpec((None, h, h), lambda b: (b, 0, 0)),
                pl.BlockSpec((None, 1, h), lambda b: (b, 0, 0)),
                pl.BlockSpec((None, 1, h), lambda b: (b, 0, 0)),
                pl.BlockSpec((None, 1, h), lambda b: (b, 0, 0)),
            ],
            out_specs=pl.BlockSpec((Bp, h), lambda b: (0, 0)),
        )
        kernel = mlp_full_kernel
        sem = ("arbitrary",)
    else:
        nk = h // tk
        grid_spec = pltpu.PrefetchScalarGridSpec(
            num_scalar_prefetch=0,
            grid=(nb, nk),                      # K axis last; both sequential deps
            in_specs=[
                pl.BlockSpec((Bp, h), lambda b, k: (0, 0)),
                pl.BlockSpec((None, tk, h), lambda b, k: (b, k, 0)),
                pl.BlockSpec((None, 1, h), lambda b, k: (b, 0, 0)),
                pl.BlockSpec((None, 1, h), lambda b, k: (b, 0, 0)),
                pl.BlockSpec((None, 1, h), lambda b, k: (b, 0, 0)),
            ],
            out_specs=pl.BlockSpec((Bp, h), lambda b, k: (0, 0)),
            scratch_shapes=[pltpu.VMEM((Bp, h), jnp.float32)],   # f32 accumulator
        )
        kernel = functools.partial(mlp_tiled_kernel, tk=tk)
        sem = ("arbitrary", "arbitrary")
    return pl.pallas_call(
        kernel,
        out_shape=jax.ShapeDtypeStruct((Bp, h), jnp.float32),
        grid_spec=grid_spec,
        compiler_params=pltpu.CompilerParams(
            dimension_semantics=sem,
            vmem_limit_bytes=_VMEM_LIMIT,
        ),
    )(x, w_stack, b_stack, g_stack, beta_stack)


def _lin1(x, w, b, *, tk):
    Bp, h = x.shape
    out_dim = w.shape[1]
    nk = h // tk
    kernel = functools.partial(lin1_kernel, tk=tk)
    return pl.pallas_call(
        kernel,
        out_shape=jax.ShapeDtypeStruct((Bp, out_dim), jnp.float32),
        grid_spec=pltpu.PrefetchScalarGridSpec(
            num_scalar_prefetch=0,
            grid=(nk,),
            in_specs=[
                pl.BlockSpec((Bp, h), lambda k: (0, 0)),          # x resident
                pl.BlockSpec((tk, out_dim), lambda k: (k, 0)),    # weight streams
                pl.BlockSpec((1, out_dim), lambda k: (0, 0)),
            ],
            out_specs=pl.BlockSpec((Bp, out_dim), lambda k: (0, 0)),
        ),
        compiler_params=pltpu.CompilerParams(
            dimension_semantics=("arbitrary",),
            vmem_limit_bytes=_VMEM_LIMIT,
        ),
    )(x, w, b)


def _projector(z, p):
    rows, clip = z.shape
    vmem = pl.BlockSpec(memory_space=pltpu.MemorySpace.VMEM)
    args = (z,
            p["proj_g0"], p["proj_beta0"], p["proj_w0"], p["proj_b0"],
            p["proj_g1"], p["proj_beta1"], p["proj_w1"], p["proj_b1"],
            p["proj_g2"], p["proj_beta2"], p["proj_w2"], p["proj_b2"])
    return pl.pallas_call(
        projector_kernel,
        out_shape=jax.ShapeDtypeStruct((rows, clip), jnp.float32),
        in_specs=[vmem] * len(args),
        out_specs=vmem,
        compiler_params=pltpu.CompilerParams(vmem_limit_bytes=_VMEM_LIMIT),
    )(*args)


# ------------------------------ parameters ----------------------------------

def init_params(key, in_dim, h, out_dim, clip_size, proj_hidden, n_blocks, *,
                lin0_k_tile=512):
    """PyTorch-Linear-style uniform(-1/sqrt(fan_in), ...) init.
    Weights stored bf16 (transposed, (in, out)); biases / LN affine f32.
    lin0 weight rows are zero-padded so in_dim is a multiple of lin0_k_tile."""
    assert h % 128 == 0, "h must be a multiple of 128"
    assert out_dim % clip_size == 0, "out_dim must be a multiple of clip_size"
    assert clip_size % 128 == 0 and proj_hidden % 128 == 0

    def lin(k, fan_in, fan_out):
        kw, kb = jax.random.split(k)
        lim = 1.0 / math.sqrt(fan_in)
        w = jax.random.uniform(kw, (fan_in, fan_out), jnp.float32, -lim, lim)
        b = jax.random.uniform(kb, (1, fan_out), jnp.float32, -lim, lim)
        return w, b

    keys = iter(jax.random.split(key, 8 + n_blocks))
    p = {}

    in_dim_pad = _round_up(in_dim, lin0_k_tile)
    w0, b0 = lin(next(keys), in_dim, h)
    w0 = jnp.pad(w0, ((0, in_dim_pad - in_dim), (0, 0)))   # zero rows: exact
    p["lin0_w"] = w0.astype(jnp.bfloat16)
    p["lin0_b"] = b0
    p["lin0_g"] = jnp.ones((1, h), jnp.float32)
    p["lin0_beta"] = jnp.zeros((1, h), jnp.float32)

    mw, mb = [], []
    for _ in range(n_blocks):
        w, b = lin(next(keys), h, h)
        mw.append(w.astype(jnp.bfloat16))
        mb.append(b[None])
    p["mlp_w"] = jnp.stack(mw)                              # (n_blocks, h, h) bf16
    p["mlp_b"] = jnp.concatenate(mb, axis=0)                # (n_blocks, 1, h)
    p["mlp_g"] = jnp.ones((n_blocks, 1, h), jnp.float32)
    p["mlp_beta"] = jnp.zeros((n_blocks, 1, h), jnp.float32)

    w1, b1 = lin(next(keys), h, out_dim)
    p["lin1_w"], p["lin1_b"] = w1.astype(jnp.bfloat16), b1

    p["proj_g0"] = jnp.ones((1, clip_size), jnp.float32)
    p["proj_beta0"] = jnp.zeros((1, clip_size), jnp.float32)
    pw0, pb0 = lin(next(keys), clip_size, proj_hidden)
    p["proj_w0"], p["proj_b0"] = pw0.astype(jnp.bfloat16), pb0
    p["proj_g1"] = jnp.ones((1, proj_hidden), jnp.float32)
    p["proj_beta1"] = jnp.zeros((1, proj_hidden), jnp.float32)
    pw1, pb1 = lin(next(keys), proj_hidden, proj_hidden)
    p["proj_w1"], p["proj_b1"] = pw1.astype(jnp.bfloat16), pb1
    p["proj_g2"] = jnp.ones((1, proj_hidden), jnp.float32)
    p["proj_beta2"] = jnp.zeros((1, proj_hidden), jnp.float32)
    pw2, pb2 = lin(next(keys), proj_hidden, clip_size)
    p["proj_w2"], p["proj_b2"] = pw2.astype(jnp.bfloat16), pb2
    return p


# ------------------------------ forward pass ---------------------------------

def brain_network_forward(params, x, *, n_blocks, clip_size, use_projector=True):
    p = params
    if x.ndim == 4:
        # fMRI volume path (81x104x83) — flatten.
        x = x.reshape(x.shape[0], -1)
    x = x.astype(jnp.float32)
    B = x.shape[0]

    Kp, h = p["lin0_w"].shape
    # pad contraction dim (zero columns match the zero-padded weight rows: exact)
    if x.shape[1] != Kp:
        x = jnp.pad(x, ((0, 0), (0, Kp - x.shape[1])))
    # pad batch to f32 sublane multiple (8)
    Bp = _round_up(B, 8)
    if Bp != B:
        x = jnp.pad(x, ((0, Bp - B), (0, 0)))

    # lin0: Linear -> LayerNorm -> GELU (Dropout = identity)
    x = _lin0(x, p["lin0_w"], p["lin0_b"], p["lin0_g"], p["lin0_beta"],
              tk=_pick_tile(Kp, 512))

    # fused residual MLP chain (adaptive weight streaming)
    x = _mlp_chain(x, p["mlp_w"], p["mlp_b"], p["mlp_g"], p["mlp_beta"],
                   tk=_choose_mlp_tile(Bp, h))
    x = x.reshape(Bp, -1)

    # lin1 (K-tiled so the weight streams under compute)
    y = _lin1(x, p["lin1_w"], p["lin1_b"], tk=_pick_tile(h, 1024))
    if not use_projector:
        return y[:B]

    out_dim = y.shape[1]
    tokens = out_dim // clip_size
    # reshape to token rows in the wrapper (trivial row-major reshape, no in-kernel relayout)
    z = y.reshape(Bp * tokens, clip_size)
    proj = _projector(z, p)
    return y[:B], proj.reshape(Bp, tokens, clip_size)[:B]


# ------------------------------ pure-JAX reference ----------------------------

def _reference_forward(params, x, *, n_blocks, clip_size):
    """Mirrors the kernel math (bf16 weights / bf16 activation casts, f32 accumulate)."""
    p = params

    def dot(a, w):
        return jnp.dot(a.astype(jnp.bfloat16).astype(jnp.float32), w.astype(jnp.float32))

    x = x.astype(jnp.float32)
    Kp = p["lin0_w"].shape[0]
    if x.shape[1] != Kp:
        x = jnp.pad(x, ((0, 0), (0, Kp - x.shape[1])))
    h = dot(x, p["lin0_w"]) + p["lin0_b"]
    h = _gelu(_layernorm(h, p["lin0_g"], p["lin0_beta"]))
    for i in range(n_blocks):
        y = dot(h, p["mlp_w"][i]) + p["mlp_b"][i]
        h = _gelu(_layernorm(y, p["mlp_g"][i], p["mlp_beta"][i])) + h
    y = dot(h, p["lin1_w"]) + p["lin1_b"]
    bs = y.shape[0]
    z = y.reshape(-1, clip_size)
    z = dot(_gelu(_layernorm(z, p["proj_g0"], p["proj_beta0"])), p["proj_w0"]) + p["proj_b0"]
    z = dot(_gelu(_layernorm(z, p["proj_g1"], p["proj_beta1"])), p["proj_w1"]) + p["proj_b1"]
    z = dot(_gelu(_layernorm(z, p["proj_g2"], p["proj_beta2"])), p["proj_w2"]) + p["proj_b2"]
    return y, z.reshape(bs, -1, clip_size)


# ------------------------------ main ------------------------------------------

if __name__ == "__main__":
    # Small demo shapes consistent with the module structure
    # (real: in_dim=15724, h=4096, out_dim=clip_size=768, proj hidden=2048, n_blocks=4).
    batch, in_dim, h = 2, 200, 256           # in_dim deliberately non-aligned -> padded to 512
    out_dim = clip_size = 128
    proj_hidden, n_blocks = 256, 4

    key = jax.random.PRNGKey(0)
    kx, kp = jax.random.split(key)
    params = init_params(kp, in_dim, h, out_dim, clip_size, proj_hidden, n_blocks)
    x = jax.random.normal(kx, (batch, in_dim), jnp.float32)

    fwd = jax.jit(functools.partial(brain_network_forward, n_blocks=n_blocks,
                                    clip_size=clip_size, use_projector=True))
    y, proj = fwd(params, x)
    jax.block_until_ready((y, proj))

    assert y.shape == (batch, out_dim)
    assert proj.shape == (batch, out_dim // clip_size, clip_size)
    assert bool(jnp.all(jnp.isfinite(y))) and bool(jnp.all(jnp.isfinite(proj)))

    y_ref, proj_ref = _reference_forward(params, x, n_blocks=n_blocks, clip_size=clip_size)
    assert jnp.allclose(y, y_ref, atol=5e-2, rtol=5e-2), float(jnp.max(jnp.abs(y - y_ref)))
    assert jnp.allclose(proj, proj_ref, atol=5e-2, rtol=5e-2), \
        float(jnp.max(jnp.abs(proj - proj_ref)))

    print("KERNEL_OK")
</pallas_src>

<mosaic_0001>
module attributes {stable_mosaic.version = 11 : i64} {
  func.func @lin1_kernel(%arg0: i32, %arg1: memref<8x256xf32, #tpu.memory_space<vmem>>, %arg2: memref<256x128xbf16, #tpu.memory_space<vmem>>, %arg3: memref<1x128xf32, #tpu.memory_space<vmem>>, %arg4: memref<8x128xf32, #tpu.memory_space<vmem>>) attributes {dimension_semantics = [#tpu.dimension_semantics<arbitrary>], iteration_bounds = array<i64: 1>, scalar_prefetch = 0 : i64, scratch_operands = 0 : i64, tpu.core_type = #tpu.core_type<tc>, window_params = [{pipeline_mode = #tpu.pipeline_mode<synchronous>, transform_indices = @transform_0, window_bounds = array<i64: 8, 256>}, {transform_indices = @transform_1, window_bounds = array<i64: 256, 128>}, {pipeline_mode = #tpu.pipeline_mode<synchronous>, transform_indices = @transform_2, window_bounds = array<i64: 1, 128>}, {pipeline_mode = #tpu.pipeline_mode<synchronous>, transform_indices = @transform_3, window_bounds = array<i64: 8, 128>}]} {
    %c0_i32 = arith.constant 0 : i32
    %0 = arith.cmpi eq, %arg0, %c0_i32 : i32
    %1 = arith.extui %0 : i1 to i32
    %c0_i32_0 = arith.constant 0 : i32
    %2 = arith.cmpi ne, %1, %c0_i32_0 : i32
    scf.if %2 {
      %cst_9 = arith.constant 0.000000e+00 : f32
      %16 = vector.broadcast %cst_9 : f32 to vector<8x128xf32>
      %c0_10 = arith.constant 0 : index
      %c0_11 = arith.constant 0 : index
      %17 = vector.load %arg4[%c0_10, %c0_11] : memref<8x128xf32, #tpu.memory_space<vmem>>, vector<8x128xf32>
      tpu.vector_store %arg4[%c0_10, %c0_11], %16 {strides = array<i32>} : memref<8x128xf32, #tpu.memory_space<vmem>>, vector<8x128xf32>,
    } else {
    }
    %c256_i32 = arith.constant 256 : i32
    %3 = arith.muli %arg0, %c256_i32 : i32
    %4 = tpu.assume_multiple %3, 256 : i32
    %c0 = arith.constant 0 : index
    %c0_1 = arith.constant 0 : index
    %5 = vector.load %arg4[%c0, %c0_1] : memref<8x128xf32, #tpu.memory_space<vmem>>, vector<8x128xf32>
    %c0_2 = arith.constant 0 : index
    %6 = arith.index_cast %4 : i32 to index
    %7 = vector.load %arg1[%c0_2, %6] : memref<8x256xf32, #tpu.memory_space<vmem>>, vector<8x256xf32>
    %c0_3 = arith.constant 0 : index
    %c0_4 = arith.constant 0 : index
    %8 = vector.load %arg2[%c0_3, %c0_4] : memref<256x128xbf16, #tpu.memory_space<vmem>>, vector<256x128xbf16>
    %9 = arith.truncf %7 : vector<8x256xf32> to vector<8x256xbf16>
    %cst = arith.constant dense<0.000000e+00> : vector<8x128xf32>
    %10 = tpu.matmul %9, %8, %cst {dimension_numbers = #tpu.dot_dimension_numbers<[1], [0], [0], [1], [0, 0, 1, 1], [], []>} : vector<8x256xbf16>, vector<256x128xbf16>, vector<8x128xf32> -> vector<8x128xf32>
    %11 = arith.addf %5, %10 : vector<8x128xf32>
    %c0_5 = arith.constant 0 : index
    %c0_6 = arith.constant 0 : index
    %12 = vector.load %arg4[%c0_5, %c0_6] : memref<8x128xf32, #tpu.memory_space<vmem>>, vector<8x128xf32>
    tpu.vector_store %arg4[%c0_5, %c0_6], %11 {strides = array<i32>} : memref<8x128xf32, #tpu.memory_space<vmem>>, vector<8x128xf32>,
    %c0_i32_7 = arith.constant 0 : i32
    %13 = arith.cmpi eq, %arg0, %c0_i32_7 : i32
    %14 = arith.extui %13 : i1 to i32
    %c0_i32_8 = arith.constant 0 : i32
    %15 = arith.cmpi ne, %14, %c0_i32_8 : i32
    scf.if %15 {
      %c0_9 = arith.constant 0 : index
      %c0_10 = arith.constant 0 : index
      %16 = vector.load %arg4[%c0_9, %c0_10] : memref<8x128xf32, #tpu.memory_space<vmem>>, vector<8x128xf32>
      %c0_11 = arith.constant 0 : index
      %c0_12 = arith.constant 0 : index
      %17 = vector.load %arg3[%c0_11, %c0_12] : memref<1x128xf32, #tpu.memory_space<vmem>>, vector<1x128xf32>
      %18 = vector.broadcast %17 : vector<1x128xf32> to vector<8x128xf32>
      %19 = arith.addf %16, %18 : vector<8x128xf32>
      %c0_13 = arith.constant 0 : index
      %c0_14 = arith.constant 0 : index
      %20 = vector.load %arg4[%c0_13, %c0_14] : memref<8x128xf32, #tpu.memory_space<vmem>>, vector<8x128xf32>
      tpu.vector_store %arg4[%c0_13, %c0_14], %19 {strides = array<i32>} : memref<8x128xf32, #tpu.memory_space<vmem>>, vector<8x128xf32>,
    } else {
    }
    return
  }
  func.func @transform_0(%arg0: i32) -> (i32, i32) {
    %c0_i32 = arith.constant 0 : i32
    %c0_i32_0 = arith.constant 0 : i32
    %c0_i32_1 = arith.constant 0 : i32
    return %c0_i32, %c0_i32_0 : i32, i32
  }
  func.func @transform_1(%arg0: i32) -> (i32, i32) {
    %c0_i32 = arith.constant 0 : i32
    %c0_i32_0 = arith.constant 0 : i32
    return %arg0, %c0_i32 : i32, i32
  }
  func.func @transform_2(%arg0: i32) -> (i32, i32) {
    %c0_i32 = arith.constant 0 : i32
    %c0_i32_0 = arith.constant 0 : i32
    %c0_i32_1 = arith.constant 0 : i32
    return %c0_i32, %c0_i32_0 : i32, i32
  }
  func.func @transform_3(%arg0: i32) -> (i32, i32) {
    %c0_i32 = arith.constant 0 : i32
    %c0_i32_0 = arith.constant 0 : i32
    %c0_i32_1 = arith.constant 0 : i32
    return %c0_i32, %c0_i32_0 : i32, i32
  }
}

module attributes {stable_mosaic.version = 11 : i64} {
  func.func @mlp_full_kernel(%arg0: i32, %arg1: memref<8x256xf32, #tpu.memory_space<vmem>>, %arg2: memref<1x256x256xbf16, #tpu.memory_space<vmem>>, %arg3: memref<1x1x256xf32, #tpu.memory_space<vmem>>, %arg4: memref<1x1x256xf32, #tpu.memory_space<vmem>>, %arg5: memref<1x1x256xf32, #tpu.memory_space<vmem>>, %arg6: memref<8x256xf32, #tpu.memory_space<vmem>>) attributes {dimension_semantics = [#tpu.dimension_semantics<arbitrary>], iteration_bounds = array<i64: 4>, scalar_prefetch = 0 : i64, scratch_operands = 0 : i64, tpu.core_type = #tpu.core_type<tc>, window_params = [{pipeline_mode = #tpu.pipeline_mode<synchronous>, transform_indices = @transform_0, window_bounds = array<i64: 8, 256>}, {transform_indices = @transform_1, window_bounds = array<i64: 1, 256, 256>}, {transform_indices = @transform_2, window_bounds = array<i64: 1, 1, 256>}, {transform_indices = @transform_3, window_bounds = array<i64: 1, 1, 256>}, {transform_indices = @transform_4, window_bounds = array<i64: 1, 1, 256>}, {pipeline_mode = #tpu.pipeline_mode<synchronous>, transform_indices = @transform_5, window_bounds = array<i64: 8, 256>}]} {
    %c0_i32 = arith.constant 0 : i32
    %0 = arith.cmpi eq, %arg0, %c0_i32 : i32
    %1 = arith.extui %0 : i1 to i32
    %c0_i32_0 = arith.constant 0 : i32
    %2 = arith.cmpi ne, %1, %c0_i32_0 : i32
    scf.if %2 {
      %c0_26 = arith.constant 0 : index
      %c0_27 = arith.constant 0 : index
      %49 = vector.load %arg1[%c0_26, %c0_27] : memref<8x256xf32, #tpu.memory_space<vmem>>, vector<8x256xf32>
      %c0_28 = arith.constant 0 : index
      %c0_29 = arith.constant 0 : index
      %50 = vector.load %arg6[%c0_28, %c0_29] : memref<8x256xf32, #tpu.memory_space<vmem>>, vector<8x256xf32>
      tpu.vector_store %arg6[%c0_28, %c0_29], %49 {strides = array<i32>} : memref<8x256xf32, #tpu.memory_space<vmem>>, vector<8x256xf32>,
    } else {
    }
    %c0 = arith.constant 0 : index
    %c0_1 = arith.constant 0 : index
    %3 = vector.load %arg6[%c0, %c0_1] : memref<8x256xf32, #tpu.memory_space<vmem>>, vector<8x256xf32>
    %c0_2 = arith.constant 0 : index
    %c0_3 = arith.constant 0 : index
    %c0_4 = arith.constant 0 : index
    %4 = vector.load %arg2[%c0_2, %c0_3, %c0_4] : memref<1x256x256xbf16, #tpu.memory_space<vmem>>, vector<1x256x256xbf16>
    %5 = vector.shape_cast %4 : vector<1x256x256xbf16> to vector<256x256xbf16>
    %6 = arith.truncf %3 : vector<8x256xf32> to vector<8x256xbf16>
    %cst = arith.constant dense<0.000000e+00> : vector<8x256xf32>
    %7 = tpu.matmul %6, %5, %cst {dimension_numbers = #tpu.dot_dimension_numbers<[1], [0], [0], [1], [0, 0, 1, 1], [], []>} : vector<8x256xbf16>, vector<256x256xbf16>, vector<8x256xf32> -> vector<8x256xf32>
    %c0_5 = arith.constant 0 : index
    %c0_6 = arith.constant 0 : index
    %c0_7 = arith.constant 0 : index
    %8 = vector.load %arg3[%c0_5, %c0_6, %c0_7] : memref<1x1x256xf32, #tpu.memory_space<vmem>>, vector<1x1x256xf32>
    %9 = vector.shape_cast %8 : vector<1x1x256xf32> to vector<1x256xf32>
    %10 = vector.broadcast %9 : vector<1x256xf32> to vector<8x256xf32>
    %11 = arith.addf %7, %10 : vector<8x256xf32>
    %c0_8 = arith.constant 0 : index
    %c0_9 = arith.constant 0 : index
    %c0_10 = arith.constant 0 : index
    %12 = vector.load %arg4[%c0_8, %c0_9, %c0_10] : memref<1x1x256xf32, #tpu.memory_space<vmem>>, vector<1x1x256xf32>
    %13 = vector.shape_cast %12 : vector<1x1x256xf32> to vector<1x256xf32>
    %c0_11 = arith.constant 0 : index
    %c0_12 = arith.constant 0 : index
    %c0_13 = arith.constant 0 : index
    %14 = vector.load %arg5[%c0_11, %c0_12, %c0_13] : memref<1x1x256xf32, #tpu.memory_space<vmem>>, vector<1x1x256xf32>
    %15 = vector.shape_cast %14 : vector<1x1x256xf32> to vector<1x256xf32>
    %cst_14 = arith.constant dense<0.000000e+00> : vector<8xf32>
    %16 = vector.multi_reduction <add>, %11, %cst_14 [1] : vector<8x256xf32> to vector<8xf32>
    %17 = vector.shape_cast %16 : vector<8xf32> to vector<8x1xf32>
    %cst_15 = arith.constant 2.560000e+02 : f32
    %18 = vector.broadcast %cst_15 : f32 to vector<8x1xf32>
    %19 = arith.divf %17, %18 : vector<8x1xf32>
    %20 = vector.broadcast %19 : vector<8x1xf32> to vector<8x256xf32>
    %21 = arith.subf %11, %20 : vector<8x256xf32>
    %22 = arith.mulf %21, %21 : vector<8x256xf32>
    %cst_16 = arith.constant dense<0.000000e+00> : vector<8xf32>
    %23 = vector.multi_reduction <add>, %22, %cst_16 [1] : vector<8x256xf32> to vector<8xf32>
    %24 = vector.shape_cast %23 : vector<8xf32> to vector<8x1xf32>
    %cst_17 = arith.constant 2.560000e+02 : f32
    %25 = vector.broadcast %cst_17 : f32 to vector<8x1xf32>
    %26 = arith.divf %24, %25 : vector<8x1xf32>
    %27 = vector.broadcast %19 : vector<8x1xf32> to vector<8x256xf32>
    %28 = arith.subf %11, %27 : vector<8x256xf32>
    %cst_18 = arith.constant 9.99999974E-6 : f32
    %29 = vector.broadcast %cst_18 : f32 to vector<8x1xf32>
    %30 = arith.addf %26, %29 : vector<8x1xf32>
    %31 = math.rsqrt %30 : vector<8x1xf32>
    %32 = vector.broadcast %31 : vector<8x1xf32> to vector<8x256xf32>
    %33 = arith.mulf %28, %32 : vector<8x256xf32>
    %34 = vector.broadcast %13 : vector<1x256xf32> to vector<8x256xf32>
    %35 = arith.mulf %33, %34 : vector<8x256xf32>
    %36 = vector.broadcast %15 : vector<1x256xf32> to vector<8x256xf32>
    %37 = arith.addf %35, %36 : vector<8x256xf32>
    %cst_19 = arith.constant 5.000000e-01 : f32
    %38 = vector.broadcast %cst_19 : f32 to vector<8x256xf32>
    %39 = arith.mulf %38, %37 : vector<8x256xf32>
    %cst_20 = arith.constant 0.707106769 : f32
    %40 = vector.broadcast %cst_20 : f32 to vector<8x256xf32>
    %41 = arith.mulf %37, %40 : vector<8x256xf32>
    %42 = math.erf %41 : vector<8x256xf32>
    %cst_21 = arith.constant 1.000000e+00 : f32
    %43 = vector.broadcast %cst_21 : f32 to vector<8x256xf32>
    %44 = arith.addf %43, %42 : vector<8x256xf32>
    %45 = arith.mulf %39, %44 : vector<8x256xf32>
    %c0_22 = arith.constant 0 : index
    %c0_23 = arith.constant 0 : index
    %46 = vector.load %arg6[%c0_22, %c0_23] : memref<8x256xf32, #tpu.memory_space<vmem>>, vector<8x256xf32>
    %47 = arith.addf %45, %46 : vector<8x256xf32>
    %c0_24 = arith.constant 0 : index
    %c0_25 = arith.constant 0 : index
    %48 = vector.load %arg6[%c0_24, %c0_25] : memref<8x256xf32, #tpu.memory_space<vmem>>, vector<8x256xf32>
    tpu.vector_store %arg6[%c0_24, %c0_25], %47 {strides = array<i32>} : memref<8x256xf32, #tpu.memory_space<vmem>>, vector<8x256xf32>,
    return
  }
  func.func @transform_0(%arg0: i32) -> (i32, i32) {
    %c0_i32 = arith.constant 0 : i32
    %c0_i32_0 = arith.constant 0 : i32
    %c0_i32_1 = arith.constant 0 : i32
    return %c0_i32, %c0_i32_0 : i32, i32
  }
  func.func @transform_1(%arg0: i32) -> (i32, i32, i32) {
    %c0_i32 = arith.constant 0 : i32
    %c0_i32_0 = arith.constant 0 : i32
    %c0_i32_1 = arith.constant 0 : i32
    return %arg0, %c0_i32, %c0_i32_0 : i32, i32, i32
  }
  func.func @transform_2(%arg0: i32) -> (i32, i32, i32) {
    %c0_i32 = arith.constant 0 : i32
    %c0_i32_0 = arith.constant 0 : i32
    %c0_i32_1 = arith.constant 0 : i32
    return %arg0, %c0_i32, %c0_i32_0 : i32, i32, i32
  }
  func.func @transform_3(%arg0: i32) -> (i32, i32, i32) {
    %c0_i32 = arith.constant 0 : i32
    %c0_i32_0 = arith.constant 0 : i32
    %c0_i32_1 = arith.constant 0 : i32
    return %arg0, %c0_i32, %c0_i32_0 : i32, i32, i32
  }
  func.func @transform_4(%arg0: i32) -> (i32, i32, i32) {
    %c0_i32 = arith.constant 0 : i32
    %c0_i32_0 = arith.constant 0 : i32
    %c0_i32_1 = arith.constant 0 : i32
    return %arg0, %c0_i32, %c0_i32_0 : i32, i32, i32
  }
  func.func @transform_5(%arg0: i32) -> (i32, i32) {
    %c0_i32 = arith.constant 0 : i32
    %c0_i32_0 = arith.constant 0 : i32
    %c0_i32_1 = arith.constant 0 : i32
    return %c0_i32, %c0_i32_0 : i32, i32
  }
}

module attributes {stable_mosaic.version = 11 : i64} {
  func.func @lin0_kernel(%arg0: i32, %arg1: memref<8x512xf32, #tpu.memory_space<vmem>>, %arg2: memref<512x256xbf16, #tpu.memory_space<vmem>>, %arg3: memref<1x256xf32, #tpu.memory_space<vmem>>, %arg4: memref<1x256xf32, #tpu.memory_space<vmem>>, %arg5: memref<1x256xf32, #tpu.memory_space<vmem>>, %arg6: memref<8x256xf32, #tpu.memory_space<vmem>>) attributes {dimension_semantics = [#tpu.dimension_semantics<arbitrary>], iteration_bounds = array<i64: 1>, scalar_prefetch = 0 : i64, scratch_operands = 0 : i64, tpu.core_type = #tpu.core_type<tc>, window_params = [{pipeline_mode = #tpu.pipeline_mode<synchronous>, transform_indices = @transform_0, window_bounds = array<i64: 8, 512>}, {transform_indices = @transform_1, window_bounds = array<i64: 512, 256>}, {pipeline_mode = #tpu.pipeline_mode<synchronous>, transform_indices = @transform_2, window_bounds = array<i64: 1, 256>}, {pipeline_mode = #tpu.pipeline_mode<synchronous>, transform_indices = @transform_3, window_bounds = array<i64: 1, 256>}, {pipeline_mode = #tpu.pipeline_mode<synchronous>, transform_indices = @transform_4, window_bounds = array<i64: 1, 256>}, {pipeline_mode = #tpu.pipeline_mode<synchronous>, transform_indices = @transform_5, window_bounds = array<i64: 8, 256>}]} {
    %c0_i32 = arith.constant 0 : i32
    %0 = arith.cmpi eq, %arg0, %c0_i32 : i32
    %1 = arith.extui %0 : i1 to i32
    %c0_i32_0 = arith.constant 0 : i32
    %2 = arith.cmpi ne, %1, %c0_i32_0 : i32
    scf.if %2 {
      %cst_9 = arith.constant 0.000000e+00 : f32
      %16 = vector.broadcast %cst_9 : f32 to vector<8x256xf32>
      %c0_10 = arith.constant 0 : index
      %c0_11 = arith.constant 0 : index
      %17 = vector.load %arg6[%c0_10, %c0_11] : memref<8x256xf32, #tpu.memory_space<vmem>>, vector<8x256xf32>
      tpu.vector_store %arg6[%c0_10, %c0_11], %16 {strides = array<i32>} : memref<8x256xf32, #tpu.memory_space<vmem>>, vector<8x256xf32>,
    } else {
    }
    %c512_i32 = arith.constant 512 : i32
    %3 = arith.muli %arg0, %c512_i32 : i32
    %4 = tpu.assume_multiple %3, 512 : i32
    %c0 = arith.constant 0 : index
    %c0_1 = arith.constant 0 : index
    %5 = vector.load %arg6[%c0, %c0_1] : memref<8x256xf32, #tpu.memory_space<vmem>>, vector<8x256xf32>
    %c0_2 = arith.constant 0 : index
    %6 = arith.index_cast %4 : i32 to index
    %7 = vector.load %arg1[%c0_2, %6] : memref<8x512xf32, #tpu.memory_space<vmem>>, vector<8x512xf32>
    %c0_3 = arith.constant 0 : index
    %c0_4 = arith.constant 0 : index
    %8 = vector.load %arg2[%c0_3, %c0_4] : memref<512x256xbf16, #tpu.memory_space<vmem>>, vector<512x256xbf16>
    %9 = arith.truncf %7 : vector<8x512xf32> to vector<8x512xbf16>
    %cst = arith.constant dense<0.000000e+00> : vector<8x256xf32>
    %10 = tpu.matmul %9, %8, %cst {dimension_numbers = #tpu.dot_dimension_numbers<[1], [0], [0], [1], [0, 0, 1, 1], [], []>} : vector<8x512xbf16>, vector<512x256xbf16>, vector<8x256xf32> -> vector<8x256xf32>
    %11 = arith.addf %5, %10 : vector<8x256xf32>
    %c0_5 = arith.constant 0 : index
    %c0_6 = arith.constant 0 : index
    %12 = vector.load %arg6[%c0_5, %c0_6] : memref<8x256xf32, #tpu.memory_space<vmem>>, vector<8x256xf32>
    tpu.vector_store %arg6[%c0_5, %c0_6], %11 {strides = array<i32>} : memref<8x256xf32, #tpu.memory_space<vmem>>, vector<8x256xf32>,
    %c0_i32_7 = arith.constant 0 : i32
    %13 = arith.cmpi eq, %arg0, %c0_i32_7 : i32
    %14 = arith.extui %13 : i1 to i32
    %c0_i32_8 = arith.constant 0 : i32
    %15 = arith.cmpi ne, %14, %c0_i32_8 : i32
    scf.if %15 {
      %c0_9 = arith.constant 0 : index
      %c0_10 = arith.constant 0 : index
      %16 = vector.load %arg6[%c0_9, %c0_10] : memref<8x256xf32, #tpu.memory_space<vmem>>, vector<8x256xf32>
      %c0_11 = arith.constant 0 : index
      %c0_12 = arith.constant 0 : index
      %17 = vector.load %arg3[%c0_11, %c0_12] : memref<1x256xf32, #tpu.memory_space<vmem>>, vector<1x256xf32>
      %18 = vector.broadcast %17 : vector<1x256xf32> to vector<8x256xf32>
      %19 = arith.addf %16, %18 : vector<8x256xf32>
      %c0_13 = arith.constant 0 : index
      %c0_14 = arith.constant 0 : index
      %20 = vector.load %arg4[%c0_13, %c0_14] : memref<1x256xf32, #tpu.memory_space<vmem>>, vector<1x256xf32>
      %c0_15 = arith.constant 0 : index
      %c0_16 = arith.constant 0 : index
      %21 = vector.load %arg5[%c0_15, %c0_16] : memref<1x256xf32, #tpu.memory_space<vmem>>, vector<1x256xf32>
      %cst_17 = arith.constant dense<0.000000e+00> : vector<8xf32>
      %22 = vector.multi_reduction <add>, %19, %cst_17 [1] : vector<8x256xf32> to vector<8xf32>
      %23 = vector.shape_cast %22 : vector<8xf32> to vector<8x1xf32>
      %cst_18 = arith.constant 2.560000e+02 : f32
      %24 = vector.broadcast %cst_18 : f32 to vector<8x1xf32>
      %25 = arith.divf %23, %24 : vector<8x1xf32>
      %26 = vector.broadcast %25 : vector<8x1xf32> to vector<8x256xf32>
      %27 = arith.subf %19, %26 : vector<8x256xf32>
      %28 = arith.mulf %27, %27 : vector<8x256xf32>
      %cst_19 = arith.constant dense<0.000000e+00> : vector<8xf32>
      %29 = vector.multi_reduction <add>, %28, %cst_19 [1] : vector<8x256xf32> to vector<8xf32>
      %30 = vector.shape_cast %29 : vector<8xf32> to vector<8x1xf32>
      %cst_20 = arith.constant 2.560000e+02 : f32
      %31 = vector.broadcast %cst_20 : f32 to vector<8x1xf32>
      %32 = arith.divf %30, %31 : vector<8x1xf32>
      %33 = vector.broadcast %25 : vector<8x1xf32> to vector<8x256xf32>
      %34 = arith.subf %19, %33 : vector<8x256xf32>
      %cst_21 = arith.constant 9.99999974E-6 : f32
      %35 = vector.broadcast %cst_21 : f32 to vector<8x1xf32>
      %36 = arith.addf %32, %35 : vector<8x1xf32>
      %37 = math.rsqrt %36 : vector<8x1xf32>
      %38 = vector.broadcast %37 : vector<8x1xf32> to vector<8x256xf32>
      %39 = arith.mulf %34, %38 : vector<8x256xf32>
      %40 = vector.broadcast %20 : vector<1x256xf32> to vector<8x256xf32>
      %41 = arith.mulf %39, %40 : vector<8x256xf32>
      %42 = vector.broadcast %21 : vector<1x256xf32> to vector<8x256xf32>
      %43 = arith.addf %41, %42 : vector<8x256xf32>
      %cst_22 = arith.constant 5.000000e-01 : f32
      %44 = vector.broadcast %cst_22 : f32 to vector<8x256xf32>
      %45 = arith.mulf %44, %43 : vector<8x256xf32>
      %cst_23 = arith.constant 0.707106769 : f32
      %46 = vector.broadcast %cst_23 : f32 to vector<8x256xf32>
      %47 = arith.mulf %43, %46 : vector<8x256xf32>
      %48 = math.erf %47 : vector<8x256xf32>
      %cst_24 = arith.constant 1.000000e+00 : f32
      %49 = vector.broadcast %cst_24 : f32 to vector<8x256xf32>
      %50 = arith.addf %49, %48 : vector<8x256xf32>
      %51 = arith.mulf %45, %50 : vector<8x256xf32>
      %c0_25 = arith.constant 0 : index
      %c0_26 = arith.constant 0 : index
      %52 = vector.load %arg6[%c0_25, %c0_26] : memref<8x256xf32, #tpu.memory_space<vmem>>, vector<8x256xf32>
      tpu.vector_store %arg6[%c0_25, %c0_26], %51 {strides = array<i32>} : memref<8x256xf32, #tpu.memory_space<vmem>>, vector<8x256xf32>,
    } else {
    }
    return
  }
  func.func @transform_0(%arg0: i32) -> (i32, i32) {
    %c0_i32 = arith.constant 0 : i32
    %c0_i32_0 = arith.constant 0 : i32
    %c0_i32_1 = arith.constant 0 : i32
    return %c0_i32, %c0_i32_0 : i32, i32
  }
  func.func @transform_1(%arg0: i32) -> (i32, i32) {
    %c0_i32 = arith.constant 0 : i32
    %c0_i32_0 = arith.constant 0 : i32
    return %arg0, %c0_i32 : i32, i32
  }
  func.func @transform_2(%arg0: i32) -> (i32, i32) {
    %c0_i32 = arith.constant 0 : i32
    %c0_i32_0 = arith.constant 0 : i32
    %c0_i32_1 = arith.constant 0 : i32
    return %c0_i32, %c0_i32_0 : i32, i32
  }
  func.func @transform_3(%arg0: i32) -> (i32, i32) {
    %c0_i32 = arith.constant 0 : i32
    %c0_i32_0 = arith.constant 0 : i32
    %c0_i32_1 = arith.constant 0 : i32
    return %c0_i32, %c0_i32_0 : i32, i32
  }
  func.func @transform_4(%arg0: i32) -> (i32, i32) {
    %c0_i32 = arith.constant 0 : i32
    %c0_i32_0 = arith.constant 0 : i32
    %c0_i32_1 = arith.constant 0 : i32
    return %c0_i32, %c0_i32_0 : i32, i32
  }
  func.func @transform_5(%arg0: i32) -> (i32, i32) {
    %c0_i32 = arith.constant 0 : i32
    %c0_i32_0 = arith.constant 0 : i32
    %c0_i32_1 = arith.constant 0 : i32
    return %c0_i32, %c0_i32_0 : i32, i32
  }
}

module attributes {stable_mosaic.version = 11 : i64} {
  func.func @projector_kernel(%arg0: memref<8x128xf32, #tpu.memory_space<vmem>>, %arg1: memref<1x128xf32, #tpu.memory_space<vmem>>, %arg2: memref<1x128xf32, #tpu.memory_space<vmem>>, %arg3: memref<128x256xbf16, #tpu.memory_space<vmem>>, %arg4: memref<1x256xf32, #tpu.memory_space<vmem>>, %arg5: memref<1x256xf32, #tpu.memory_space<vmem>>, %arg6: memref<1x256xf32, #tpu.memory_space<vmem>>, %arg7: memref<256x256xbf16, #tpu.memory_space<vmem>>, %arg8: memref<1x256xf32, #tpu.memory_space<vmem>>, %arg9: memref<1x256xf32, #tpu.memory_space<vmem>>, %arg10: memref<1x256xf32, #tpu.memory_space<vmem>>, %arg11: memref<256x128xbf16, #tpu.memory_space<vmem>>, %arg12: memref<1x128xf32, #tpu.memory_space<vmem>>, %arg13: memref<8x128xf32, #tpu.memory_space<vmem>>) attributes {dimension_semantics = [], scalar_prefetch = 0 : i64, scratch_operands = 0 : i64, tpu.core_type = #tpu.core_type<tc>} {
    %c0 = arith.constant 0 : index
    %c0_0 = arith.constant 0 : index
    %0 = vector.load %arg0[%c0, %c0_0] : memref<8x128xf32, #tpu.memory_space<vmem>>, vector<8x128xf32>
    %c0_1 = arith.constant 0 : index
    %c0_2 = arith.constant 0 : index
    %1 = vector.load %arg1[%c0_1, %c0_2] : memref<1x128xf32, #tpu.memory_space<vmem>>, vector<1x128xf32>
    %c0_3 = arith.constant 0 : index
    %c0_4 = arith.constant 0 : index
    %2 = vector.load %arg2[%c0_3, %c0_4] : memref<1x128xf32, #tpu.memory_space<vmem>>, vector<1x128xf32>
    %cst = arith.constant dense<0.000000e+00> : vector<8xf32>
    %3 = vector.multi_reduction <add>, %0, %cst [1] : vector<8x128xf32> to vector<8xf32>
    %4 = vector.shape_cast %3 : vector<8xf32> to vector<8x1xf32>
    %cst_5 = arith.constant 1.280000e+02 : f32
    %5 = vector.broadcast %cst_5 : f32 to vector<8x1xf32>
    %6 = arith.divf %4, %5 : vector<8x1xf32>
    %7 = vector.broadcast %6 : vector<8x1xf32> to vector<8x128xf32>
    %8 = arith.subf %0, %7 : vector<8x128xf32>
    %9 = arith.mulf %8, %8 : vector<8x128xf32>
    %cst_6 = arith.constant dense<0.000000e+00> : vector<8xf32>
    %10 = vector.multi_reduction <add>, %9, %cst_6 [1] : vector<8x128xf32> to vector<8xf32>
    %11 = vector.shape_cast %10 : vector<8xf32> to vector<8x1xf32>
    %cst_7 = arith.constant 1.280000e+02 : f32
    %12 = vector.broadcast %cst_7 : f32 to vector<8x1xf32>
    %13 = arith.divf %11, %12 : vector<8x1xf32>
    %14 = vector.broadcast %6 : vector<8x1xf32> to vector<8x128xf32>
    %15 = arith.subf %0, %14 : vector<8x128xf32>
    %cst_8 = arith.constant 9.99999974E-6 : f32
    %16 = vector.broadcast %cst_8 : f32 to vector<8x1xf32>
    %17 = arith.addf %13, %16 : vector<8x1xf32>
    %18 = math.rsqrt %17 : vector<8x1xf32>
    %19 = vector.broadcast %18 : vector<8x1xf32> to vector<8x128xf32>
    %20 = arith.mulf %15, %19 : vector<8x128xf32>
    %21 = vector.broadcast %1 : vector<1x128xf32> to vector<8x128xf32>
    %22 = arith.mulf %20, %21 : vector<8x128xf32>
    %23 = vector.broadcast %2 : vector<1x128xf32> to vector<8x128xf32>
    %24 = arith.addf %22, %23 : vector<8x128xf32>
    %cst_9 = arith.constant 5.000000e-01 : f32
    %25 = vector.broadcast %cst_9 : f32 to vector<8x128xf32>
    %26 = arith.mulf %25, %24 : vector<8x128xf32>
    %cst_10 = arith.constant 0.707106769 : f32
    %27 = vector.broadcast %cst_10 : f32 to vector<8x128xf32>
    %28 = arith.mulf %24, %27 : vector<8x128xf32>
    %29 = math.erf %28 : vector<8x128xf32>
    %cst_11 = arith.constant 1.000000e+00 : f32
    %30 = vector.broadcast %cst_11 : f32 to vector<8x128xf32>
    %31 = arith.addf %30, %29 : vector<8x128xf32>
    %32 = arith.mulf %26, %31 : vector<8x128xf32>
    %c0_12 = arith.constant 0 : index
    %c0_13 = arith.constant 0 : index
    %33 = vector.load %arg3[%c0_12, %c0_13] : memref<128x256xbf16, #tpu.memory_space<vmem>>, vector<128x256xbf16>
    %34 = arith.truncf %32 : vector<8x128xf32> to vector<8x128xbf16>
    %cst_14 = arith.constant dense<0.000000e+00> : vector<8x256xf32>
    %35 = tpu.matmul %34, %33, %cst_14 {dimension_numbers = #tpu.dot_dimension_numbers<[1], [0], [0], [1], [0, 0, 1, 1], [], []>} : vector<8x128xbf16>, vector<128x256xbf16>, vector<8x256xf32> -> vector<8x256xf32>
    %c0_15 = arith.constant 0 : index
    %c0_16 = arith.constant 0 : index
    %36 = vector.load %arg4[%c0_15, %c0_16] : memref<1x256xf32, #tpu.memory_space<vmem>>, vector<1x256xf32>
    %37 = vector.broadcast %36 : vector<1x256xf32> to vector<8x256xf32>
    %38 = arith.addf %35, %37 : vector<8x256xf32>
    %c0_17 = arith.constant 0 : index
    %c0_18 = arith.constant 0 : index
    %39 = vector.load %arg5[%c0_17, %c0_18] : memref<1x256xf32, #tpu.memory_space<vmem>>, vector<1x256xf32>
    %c0_19 = arith.constant 0 : index
    %c0_20 = arith.constant 0 : index
    %40 = vector.load %arg6[%c0_19, %c0_20] : memref<1x256xf32, #tpu.memory_space<vmem>>, vector<1x256xf32>
    %cst_21 = arith.constant dense<0.000000e+00> : vector<8xf32>
    %41 = vector.multi_reduction <add>, %38, %cst_21 [1] : vector<8x256xf32> to vector<8xf32>
    %42 = vector.shape_cast %41 : vector<8xf32> to vector<8x1xf32>
    %cst_22 = arith.constant 2.560000e+02 : f32
    %43 = vector.broadcast %cst_22 : f32 to vector<8x1xf32>
    %44 = arith.divf %42, %43 : vector<8x1xf32>
    %45 = vector.broadcast %44 : vector<8x1xf32> to vector<8x256xf32>
    %46 = arith.subf %38, %45 : vector<8x256xf32>
    %47 = arith.mulf %46, %46 : vector<8x256xf32>
    %cst_23 = arith.constant dense<0.000000e+00> : vector<8xf32>
    %48 = vector.multi_reduction <add>, %47, %cst_23 [1] : vector<8x256xf32> to vector<8xf32>
    %49 = vector.shape_cast %48 : vector<8xf32> to vector<8x1xf32>
    %cst_24 = arith.constant 2.560000e+02 : f32
    %50 = vector.broadcast %cst_24 : f32 to vector<8x1xf32>
    %51 = arith.divf %49, %50 : vector<8x1xf32>
    %52 = vector.broadcast %44 : vector<8x1xf32> to vector<8x256xf32>
    %53 = arith.subf %38, %52 : vector<8x256xf32>
    %cst_25 = arith.constant 9.99999974E-6 : f32
    %54 = vector.broadcast %cst_25 : f32 to vector<8x1xf32>
    %55 = arith.addf %51, %54 : vector<8x1xf32>
    %56 = math.rsqrt %55 : vector<8x1xf32>
    %57 = vector.broadcast %56 : vector<8x1xf32> to vector<8x256xf32>
    %58 = arith.mulf %53, %57 : vector<8x256xf32>
    %59 = vector.broadcast %39 : vector<1x256xf32> to vector<8x256xf32>
    %60 = arith.mulf %58, %59 : vector<8x256xf32>
    %61 = vector.broadcast %40 : vector<1x256xf32> to vector<8x256xf32>
    %62 = arith.addf %60, %61 : vector<8x256xf32>
    %cst_26 = arith.constant 5.000000e-01 : f32
    %63 = vector.broadcast %cst_26 : f32 to vector<8x256xf32>
    %64 = arith.mulf %63, %62 : vector<8x256xf32>
    %cst_27 = arith.constant 0.707106769 : f32
    %65 = vector.broadcast %cst_27 : f32 to vector<8x256xf32>
    %66 = arith.mulf %62, %65 : vector<8x256xf32>
    %67 = math.erf %66 : vector<8x256xf32>
    %cst_28 = arith.constant 1.000000e+00 : f32
    %68 = vector.broadcast %cst_28 : f32 to vector<8x256xf32>
    %69 = arith.addf %68, %67 : vector<8x256xf32>
    %70 = arith.mulf %64, %69 : vector<8x256xf32>
    %c0_29 = arith.constant 0 : index
    %c0_30 = arith.constant 0 : index
    %71 = vector.load %arg7[%c0_29, %c0_30] : memref<256x256xbf16, #tpu.memory_space<vmem>>, vector<256x256xbf16>
    %72 = arith.truncf %70 : vector<8x256xf32> to vector<8x256xbf16>
    %cst_31 = arith.constant dense<0.000000e+00> : vector<8x256xf32>
    %73 = tpu.matmul %72, %71, %cst_31 {dimension_numbers = #tpu.dot_dimension_numbers<[1], [0], [0], [1], [0, 0, 1, 1], [], []>} : vector<8x256xbf16>, vector<256x256xbf16>, vector<8x256xf32> -> vector<8x256xf32>
    %c0_32 = arith.constant 0 : index
    %c0_33 = arith.constant 0 : index
    %74 = vector.load %arg8[%c0_32, %c0_33] : memref<1x256xf32, #tpu.memory_space<vmem>>, vector<1x256xf32>
    %75 = vector.broadcast %74 : vector<1x256xf32> to vector<8x256xf32>
    %76 = arith.addf %73, %75 : vector<8x256xf32>
    %c0_34 = arith.constant 0 : index
    %c0_35 = arith.constant 0 : index
    %77 = vector.load %arg9[%c0_34, %c0_35] : memref<1x256xf32, #tpu.memory_space<vmem>>, vector<1x256xf32>
    %c0_36 = arith.constant 0 : index
    %c0_37 = arith.constant 0 : index
    %78 = vector.load %arg10[%c0_36, %c0_37] : memref<1x256xf32, #tpu.memory_space<vmem>>, vector<1x256xf32>
    %cst_38 = arith.constant dense<0.000000e+00> : vector<8xf32>
    %79 = vector.multi_reduction <add>, %76, %cst_38 [1] : vector<8x256xf32> to vector<8xf32>
    %80 = vector.shape_cast %79 : vector<8xf32> to vector<8x1xf32>
    %cst_39 = arith.constant 2.560000e+02 : f32
    %81 = vector.broadcast %cst_39 : f32 to vector<8x1xf32>
    %82 = arith.divf %80, %81 : vector<8x1xf32>
    %83 = vector.broadcast %82 : vector<8x1xf32> to vector<8x256xf32>
    %84 = arith.subf %76, %83 : vector<8x256xf32>
    %85 = arith.mulf %84, %84 : vector<8x256xf32>
    %cst_40 = arith.constant dense<0.000000e+00> : vector<8xf32>
    %86 = vector.multi_reduction <add>, %85, %cst_40 [1] : vector<8x256xf32> to vector<8xf32>
    %87 = vector.shape_cast %86 : vector<8xf32> to vector<8x1xf32>
    %cst_41 = arith.constant 2.560000e+02 : f32
    %88 = vector.broadcast %cst_41 : f32 to vector<8x1xf32>
    %89 = arith.divf %87, %88 : vector<8x1xf32>
    %90 = vector.broadcast %82 : vector<8x1xf32> to vector<8x256xf32>
    %91 = arith.subf %76, %90 : vector<8x256xf32>
    %cst_42 = arith.constant 9.99999974E-6 : f32
    %92 = vector.broadcast %cst_42 : f32 to vector<8x1xf32>
    %93 = arith.addf %89, %92 : vector<8x1xf32>
    %94 = math.rsqrt %93 : vector<8x1xf32>
    %95 = vector.broadcast %94 : vector<8x1xf32> to vector<8x256xf32>
    %96 = arith.mulf %91, %95 : vector<8x256xf32>
    %97 = vector.broadcast %77 : vector<1x256xf32> to vector<8x256xf32>
    %98 = arith.mulf %96, %97 : vector<8x256xf32>
    %99 = vector.broadcast %78 : vector<1x256xf32> to vector<8x256xf32>
    %100 = arith.addf %98, %99 : vector<8x256xf32>
    %cst_43 = arith.constant 5.000000e-01 : f32
    %101 = vector.broadcast %cst_43 : f32 to vector<8x256xf32>
    %102 = arith.mulf %101, %100 : vector<8x256xf32>
    %cst_44 = arith.constant 0.707106769 : f32
    %103 = vector.broadcast %cst_44 : f32 to vector<8x256xf32>
    %104 = arith.mulf %100, %103 : vector<8x256xf32>
    %105 = math.erf %104 : vector<8x256xf32>
    %cst_45 = arith.constant 1.000000e+00 : f32
    %106 = vector.broadcast %cst_45 : f32 to vector<8x256xf32>
    %107 = arith.addf %106, %105 : vector<8x256xf32>
    %108 = arith.mulf %102, %107 : vector<8x256xf32>
    %c0_46 = arith.constant 0 : index
    %c0_47 = arith.constant 0 : index
    %109 = vector.load %arg11[%c0_46, %c0_47] : memref<256x128xbf16, #tpu.memory_space<vmem>>, vector<256x128xbf16>
    %110 = arith.truncf %108 : vector<8x256xf32> to vector<8x256xbf16>
    %cst_48 = arith.constant dense<0.000000e+00> : vector<8x128xf32>
    %111 = tpu.matmul %110, %109, %cst_48 {dimension_numbers = #tpu.dot_dimension_numbers<[1], [0], [0], [1], [0, 0, 1, 1], [], []>} : vector<8x256xbf16>, vector<256x128xbf16>, vector<8x128xf32> -> vector<8x128xf32>
    %c0_49 = arith.constant 0 : index
    %c0_50 = arith.constant 0 : index
    %112 = vector.load %arg12[%c0_49, %c0_50] : memref<1x128xf32, #tpu.memory_space<vmem>>, vector<1x128xf32>
    %113 = vector.broadcast %112 : vector<1x128xf32> to vector<8x128xf32>
    %114 = arith.addf %111, %113 : vector<8x128xf32>
    %c0_51 = arith.constant 0 : index
    %c0_52 = arith.constant 0 : index
    %115 = vector.load %arg13[%c0_51, %c0_52] : memref<8x128xf32, #tpu.memory_space<vmem>>, vector<8x128xf32>
    tpu.vector_store %arg13[%c0_51, %c0_52], %114 {strides = array<i32>} : memref<8x128xf32, #tpu.memory_space<vmem>>, vector<8x128xf32>,
    return
  }
}

</mosaic_0001>

<llo_original>
// kernel: brain_network_forward.6
$region0: #{brain_network_forward.6}
  #allocation0 [shape = 'u32[]', space=smem, size = 0x4, offset = 0x4, fixed_abs, tag = 'smem constant byte address 0x4 - core index']
  #allocation1 [shape = 'u32[144,128]{1,0:T(1,128)}', space=vmem, size = 0x12000, scoped, tag = 'internal scratch']
  %s0 = inlined_call_operand.vmem [shape: f32[8,256], index: 0, kind: input, shape index: {}]
  %s1 = inlined_call_operand.vmem [shape: bf16[256,128], index: 1, kind: input, shape index: {}]
  %s2 = inlined_call_operand.vmem [shape: f32[1,128], index: 2, kind: input, shape index: {}]
  %s3 = inlined_call_operand.vmem [shape: f32[8,128], index: 3, kind: output, shape index: {}]
  %s4 = sld [smem:[#allocation0]]
  $region30: #{brain_network_forward.6} parent=0
    _
  %s6 = ssub.s32 1, %s4
  %s7 = scalar_select 0, %s6, %s4
  // Predicated region
  $region2: #{brain_network_forward.6} parent=0 // pred_check
    _
  $region3: #{brain_network_forward.6} parent=0 // pred_check_branch
    %9 = sbr.rel (0) target = $region5
  $region4: #{brain_network_forward.6} parent=0 // pred_region
    _
  $region5: #{brain_network_forward.6} parent=0 // pred_fallthru
    _
  // Predicated region
  $region6: #{brain_network_forward.6} parent=0 // pred_check
    _
  $region7: #{brain_network_forward.6} parent=0 // pred_check_branch
    %11 = sbr.rel (0) target = $region9
  $region8: #{brain_network_forward.6} parent=0 // pred_region
    _
  $region9: #{brain_network_forward.6} parent=0 // pred_fallthru
    _
  // Predicated region
  $region10: #{brain_network_forward.6} parent=0 // pred_check
    _
  $region11: #{brain_network_forward.6} parent=0 // pred_check_branch
    %13 = sbr.rel (0) target = $region13
  $region12: #{brain_network_forward.6} parent=0 // pred_region
    _
  $region13: #{brain_network_forward.6} parent=0 // pred_fallthru
    _
  %p15 = scmp.eq.s32.totalorder 0, 0
  // Predicated region
  $region14: #{brain_network_forward.6} parent=0 // pred_check
    %p16 = pneg %p15
  $region15: #{brain_network_forward.6} parent=0 // pred_check_branch
    %18 = sbr.rel (%p16) target = $region17
  $region16: #{brain_network_forward.6} parent=0 // pred_region
    %19 = vst [vmem:[%s3] sm:$0xff] 0.0
  $region17: #{brain_network_forward.6} parent=0 // pred_fallthru
    _
  %s20 = smul.u32 0, 256
  %v21 = vld [vmem:[%s3] sm:$0xff]
  %s22 = sshra.s32 %s20, 7
  %s23 = sand.u32 %s20, 127
  %s24 = smul.addr %s22, 8
  %s25 = scalar_lea.vmem %s0, %s24
  %v26 = vld [vmem:[%s25] sm:$0xff]
  %v27 = vld [vmem:[%s25 + $0x8] sm:$0xff]
  %v28 = vld [vmem:[%s1] sm:$0xf]
  %v29 = vld [vmem:[%s1 + $0x4] sm:$0xf]
  %v30 = vld [vmem:[%s1 + $0x8] sm:$0xf]
  %v31 = vld [vmem:[%s1 + $0xc] sm:$0xf]
  %v32 = vld [vmem:[%s1 + $0x10] sm:$0xf]
  %v33 = vld [vmem:[%s1 + $0x14] sm:$0xf]
  %v34 = vld [vmem:[%s1 + $0x18] sm:$0xf]
  %v35 = vld [vmem:[%s1 + $0x1c] sm:$0xf]
  %v36 = vld [vmem:[%s1 + $0x20] sm:$0xf]
  %v37 = vld [vmem:[%s1 + $0x24] sm:$0xf]
  %v38 = vld [vmem:[%s1 + $0x28] sm:$0xf]
  %v39 = vld [vmem:[%s1 + $0x2c] sm:$0xf]
  %v40 = vld [vmem:[%s1 + $0x30] sm:$0xf]
  %v41 = vld [vmem:[%s1 + $0x34] sm:$0xf]
  %v42 = vld [vmem:[%s1 + $0x38] sm:$0xf]
  %v43 = vld [vmem:[%s1 + $0x3c] sm:$0xf]
  %v44 = vld [vmem:[%s1 + $0x40] sm:$0xf]
  %v45 = vld [vmem:[%s1 + $0x44] sm:$0xf]
  %v46 = vld [vmem:[%s1 + $0x48] sm:$0xf]
  %v47 = vld [vmem:[%s1 + $0x4c] sm:$0xf]
  %v48 = vld [vmem:[%s1 + $0x50] sm:$0xf]
  %v49 = vld [vmem:[%s1 + $0x54] sm:$0xf]
  %v50 = vld [vmem:[%s1 + $0x58] sm:$0xf]
  %v51 = vld [vmem:[%s1 + $0x5c] sm:$0xf]
  %v52 = vld [vmem:[%s1 + $0x60] sm:$0xf]
  %v53 = vld [vmem:[%s1 + $0x64] sm:$0xf]
  %v54 = vld [vmem:[%s1 + $0x68] sm:$0xf]
  %v55 = vld [vmem:[%s1 + $0x6c] sm:$0xf]
  %v56 = vld [vmem:[%s1 + $0x70] sm:$0xf]
  %v57 = vld [vmem:[%s1 + $0x74] sm:$0xf]
  %v58 = vld [vmem:[%s1 + $0x78] sm:$0xf]
  %v59 = vld [vmem:[%s1 + $0x7c] sm:$0xf]
  %v60 = vpack.c.bf16 %v26, %v26
  %v61 = vpack.c.bf16 %v27, %v27
  %v94 = vunpack.c.l.b16 %v28
  %v95 = vunpack.c.l.b16 %v29
  %v96 = vunpack.c.l.b16 %v30
  %v97 = vunpack.c.l.b16 %v31
  %v98 = vunpack.c.l.b16 %v32
  %v99 = vunpack.c.l.b16 %v33
  %v100 = vunpack.c.l.b16 %v34
  %v101 = vunpack.c.l.b16 %v35
  %v102 = vunpack.c.l.b16 %v36
  %v103 = vunpack.c.l.b16 %v37
  %v104 = vunpack.c.l.b16 %v38
  %v105 = vunpack.c.l.b16 %v39
  %v106 = vunpack.c.l.b16 %v40
  %v107 = vunpack.c.l.b16 %v41
  %v108 = vunpack.c.l.b16 %v42
  %v109 = vunpack.c.l.b16 %v43
  %v110 = vunpack.c.l.b16 %v44
  %v111 = vunpack.c.l.b16 %v45
  %v112 = vunpack.c.l.b16 %v46
  %v113 = vunpack.c.l.b16 %v47
  %v114 = vunpack.c.l.b16 %v48
  %v115 = vunpack.c.l.b16 %v49
  %v116 = vunpack.c.l.b16 %v50
  %v117 = vunpack.c.l.b16 %v51
  %v118 = vunpack.c.l.b16 %v52
  %v119 = vunpack.c.l.b16 %v53
  %v120 = vunpack.c.l.b16 %v54
  %v121 = vunpack.c.l.b16 %v55
  %v122 = vunpack.c.l.b16 %v56
  %v123 = vunpack.c.l.b16 %v57
  %v124 = vunpack.c.l.b16 %v58
  %v125 = vunpack.c.l.b16 %v59
  %v126 = vpack.c.b16 %v95, %v94
  %v127 = vpack.c.b16 %v97, %v96
  %v128 = vpack.c.b16 %v99, %v98
  %v129 = vpack.c.b16 %v101, %v100
  %v130 = vpack.c.b16 %v103, %v102
  %v131 = vpack.c.b16 %v105, %v104
  %v132 = vpack.c.b16 %v107, %v106
  %v133 = vpack.c.b16 %v109, %v108
  %v134 = vpack.c.b16 %v111, %v110
  %v135 = vpack.c.b16 %v113, %v112
  %v136 = vpack.c.b16 %v115, %v114
  %v137 = vpack.c.b16 %v117, %v116
  %v138 = vpack.c.b16 %v119, %v118
  %v139 = vpack.c.b16 %v121, %v120
  %v140 = vpack.c.b16 %v123, %v122
  %v141 = vpack.c.b16 %v125, %v124
  %158 = vmatprep.subr.bf16.mxu0 0
  %159 = vmatpush1.bf16.msra.mxu0 %v126
  %160 = vmatprep.subr.bf16.mxu0 0
  %161 = vmatpush1.bf16.msra.mxu0 %v127
  %162 = vmatprep.subr.bf16.mxu0 0
  %163 = vmatpush1.bf16.msra.mxu0 %v128
  %164 = vmatprep.subr.bf16.mxu0 0
  %165 = vmatpush1.bf16.msra.mxu0 %v129
  %166 = vmatprep.subr.bf16.mxu0 0
  %167 = vmatpush1.bf16.msra.mxu0 %v130
  %168 = vmatprep.subr.bf16.mxu0 0
  %169 = vmatpush1.bf16.msra.mxu0 %v131
  %170 = vmatprep.subr.bf16.mxu0 0
  %171 = vmatpush1.bf16.msra.mxu0 %v132
  %172 = vmatprep.subr.bf16.mxu0 0
  %173 = vmatpush1.bf16.msra.mxu0 %v133
  %174 = vmatprep.subr.bf16.mxu0 0
  %175 = vmatpush1.bf16.msra.mxu0 %v134
  %176 = vmatprep.subr.bf16.mxu0 0
  %177 = vmatpush1.bf16.msra.mxu0 %v135
  %178 = vmatprep.subr.bf16.mxu0 0
  %179 = vmatpush1.bf16.msra.mxu0 %v136
  %180 = vmatprep.subr.bf16.mxu0 0
  %181 = vmatpush1.bf16.msra.mxu0 %v137
  %182 = vmatprep.subr.bf16.mxu0 0
  %183 = vmatpush1.bf16.msra.mxu0 %v138
  %184 = vmatprep.subr.bf16.mxu0 0
  %185 = vmatpush1.bf16.msra.mxu0 %v139
  %186 = vmatprep.subr.bf16.mxu0 0
  %187 = vmatpush1.bf16.msra.mxu0 %v140
  %188 = vmatprep.subr.bf16.mxu0 0
  %189 = vmatpush1.bf16.msra.mxu0 %v141
  %190 = vmatprep.mubr.bf16.mxu0 %v61
  %191 = vmatmul.mubr.bf16.gmra.mrb[0].mxu0 %v60
  %v192 = vpop.f32.mrb[0].mxu0
  %v193 = vadd.f32 0.0, %v192
  %v194 = vpop.f32.mrb[0].mxu0
  %v195 = vpop.f32.mrb[0].mxu0
  %v196 = vpop.f32.mrb[0].mxu0
  %197 = vdwg.mxu0
  %v198 = vadd.f32 %v21, %v193
  %199 = vst [vmem:[%s3] sm:$0xff] %v198
  // Predicated region
  $region18: #{brain_network_forward.6} parent=0 // pred_check
    %p200 = pneg %p15
  $region19: #{brain_network_forward.6} parent=0 // pred_check_branch
    %202 = sbr.rel (%p200) target = $region21
  $region20: #{brain_network_forward.6} parent=0 // pred_region
    %v203 = vld [vmem:[%s3] sm:$0xff]
    %v204 = vld [vmem:[%s2] sm:$0x1]
    %v206 = vlaneseq
    %v207 = vshrl.u32 %v206, 7
    %v208 = vsub.s32 0, %v207
    %v209 = vrot.slane %v204, %v208
    %v211 = vadd.f32 %v203, %v209
    %212 = vst [vmem:[%s3] sm:$0xff] %v211
  $region21: #{brain_network_forward.6} parent=0 // pred_fallthru
    _
  // Predicated region
  $region22: #{brain_network_forward.6} parent=0 // pred_check
    _
  $region23: #{brain_network_forward.6} parent=0 // pred_check_branch
    %214 = sbr.rel (0) target = $region25
  $region24: #{brain_network_forward.6} parent=0 // pred_region
    _
  $region25: #{brain_network_forward.6} parent=0 // pred_fallthru
    _
  // Predicated region
  $region26: #{brain_network_forward.6} parent=0 // pred_check
    _
  $region27: #{brain_network_forward.6} parent=0 // pred_check_branch
    %216 = sbr.rel (0) target = $region29
  $region28: #{brain_network_forward.6} parent=0 // pred_region
    _
  $region29: #{brain_network_forward.6} parent=0 // pred_fallthru
    _

// kernel: brain_network_forward.5
$region0: #{brain_network_forward.5}
  #allocation0 [shape = 'u32[]', space=smem, size = 0x4, offset = 0x4, fixed_abs, tag = 'smem constant byte address 0x4 - core index']
  #allocation1 [shape = 'u32[144,128]{1,0:T(1,128)}', space=vmem, size = 0x12000, scoped, tag = 'internal scratch']
  %s0 = inlined_call_operand.vmem [shape: f32[8,256], index: 0, kind: input, shape index: {}]
  %s1 = inlined_call_operand.hbm [shape: bf16[4,256,256], index: 1, kind: input, shape index: {}]
  %s2 = inlined_call_operand.vmem [shape: f32[4,1,256], index: 2, kind: input, shape index: {}]
  %s3 = inlined_call_operand.vmem [shape: f32[4,1,256], index: 3, kind: input, shape index: {}]
  %s4 = inlined_call_operand.vmem [shape: f32[4,1,256], index: 4, kind: input, shape index: {}]
  %s5 = inlined_call_operand.vmem [shape: f32[8,256], index: 5, kind: output, shape index: {}]
  %s6 = sld [smem:[#allocation0]]
  $region61: #{brain_network_forward.5} parent=0
    _
  %s8 = ssub.s32 1, %s6
  %s9 = scalar_select 0, %s8, %s6
  $region1: #{brain_network_forward.5} parent=0
    #allocation2 [shape = 'u8[262144]{0}', space=vmem, size = 0x40000, scoped, tag = 'input window, operand 1']
    #allocation3 [shape = 's32[2]{0}', space=sflag, size = 0x8, scoped, tag = 'scoped memory for brain_network_forward.5']
    %10 = vsyncpa [#allocation3], 0
    %s11 = scalar_lea.sflag [#allocation3], 1
    %12 = vsyncpa %s11, 0
    loop: start=0, step=1, limit=6
    $region2: #{brain_network_forward.5} parent=1 // loop_pre_header
      _
    $region3: #{brain_network_forward.5} parent=1 // loop_header
      %s14 = sphi 0, %s18
      %p15 = scmp.ge.s32.totalorder %s14, 6
      %s22 = sphi 0, %s22
      %s24 = sphi 0, %s22
      %s25 = sphi 0, %s24
      %s39 = sphi 0, %s25
      %s45 = sphi 0, %s47
      %s48 = sphi 0, %s45
      %s49 = sphi 0, %s48
      %s65 = sphi 0, %s49
      %s71 = sphi 0, %s73
      %s74 = sphi 0, %s71
      %s75 = sphi 0, %s74
      %s91 = sphi 0, %s75
      %s97 = sphi 0, %s99
      %s100 = sphi 0, %s97
      %s101 = sphi 0, %s100
      %s117 = sphi 0, %s101
      %s123 = sphi 0, %s125
      %s126 = sphi 0, %s123
      %s127 = sphi 0, %s126
      %s143 = sphi 0, %s127
      %s147 = sphi 0, %s147
      %s149 = sphi 0, %s147
      %s150 = sphi 0, %s149
      %s164 = sphi 0, %s150
    $region4: #{brain_network_forward.5} parent=1 // loop_header_branch
      %17 = sbr.rel (%p15) target = $region8
    $region5: #{brain_network_forward.5} parent=1 // loop_body
      %s19 = ssub.s32 %s14, 1
      %s20 = ssub.s32 %s14, 2
      %s21 = sadd.s32 %s14, 1
      %s23 = sadd.s32 %s22, 1
      %p26 = scmp.eq.s32.totalorder %s14, 3
      %p27 = scmp.ne.s32.totalorder %s22, %s24
      %p28 = scmp.eq.s32.totalorder %s14, 0
      %p29 = por %p27, %p28
      %p30 = scmp.ne.s32.totalorder %s22, %s24
      %p31 = scmp.eq.s32.totalorder %s19, 3
      %p32 = por %p30, %p31
      %p33 = scmp.ne.s32.totalorder %s24, %s25
      %p34 = scmp.eq.s32.totalorder %s19, 0
      %p35 = por %p33, %p34
      %p36 = scmp.ne.s32.totalorder %s24, %s25
      %p37 = scmp.eq.s32.totalorder %s20, 3
      %p38 = por %p36, %p37
      %p40 = scmp.ne.s32.totalorder %s25, %s39
      %p41 = scmp.eq.s32.totalorder %s20, 0
      %p42 = por %p40, %p41
      %s43 = ssub.s32 %s14, %s21
      %p44 = scmp.eq.s32.totalorder %s43, 0
      %s46 = sadd.s32 %s45, 1
      %s47 = scalar_select %p44, %s45, %s46
      %p50 = pneg %p44
      %p51 = scmp.eq.s32.totalorder %s14, 3
      %p52 = por %p50, %p51
      %p53 = scmp.ne.s32.totalorder %s45, %s48
      %p54 = scmp.eq.s32.totalorder %s14, 0
      %p55 = por %p53, %p54
      %p56 = scmp.ne.s32.totalorder %s45, %s48
      %p57 = scmp.eq.s32.totalorder %s19, 3
      %p58 = por %p56, %p57
      %p59 = scmp.ne.s32.totalorder %s48, %s49
      %p60 = scmp.eq.s32.totalorder %s19, 0
      %p61 = por %p59, %p60
      %p62 = scmp.ne.s32.totalorder %s48, %s49
      %p63 = scmp.eq.s32.totalorder %s20, 3
      %p64 = por %p62, %p63
      %p66 = scmp.ne.s32.totalorder %s49, %s65
      %p67 = scmp.eq.s32.totalorder %s20, 0
      %p68 = por %p66, %p67
      %s69 = ssub.s32 %s14, %s21
      %p70 = scmp.eq.s32.totalorder %s69, 0
      %s72 = sadd.s32 %s71, 1
      %s73 = scalar_select %p70, %s71, %s72
      %p76 = pneg %p70
      %p77 = scmp.eq.s32.totalorder %s14, 3
      %p78 = por %p76, %p77
      %p79 = scmp.ne.s32.totalorder %s71, %s74
      %p80 = scmp.eq.s32.totalorder %s14, 0
      %p81 = por %p79, %p80
      %p82 = scmp.ne.s32.totalorder %s71, %s74
      %p83 = scmp.eq.s32.totalorder %s19, 3
      %p84 = por %p82, %p83
      %p85 = scmp.ne.s32.totalorder %s74, %s75
      %p86 = scmp.eq.s32.totalorder %s19, 0
      %p87 = por %p85, %p86
      %p88 = scmp.ne.s32.totalorder %s74, %s75
      %p89 = scmp.eq.s32.totalorder %s20, 3
      %p90 = por %p88, %p89
      %p92 = scmp.ne.s32.totalorder %s75, %s91
      %p93 = scmp.eq.s32.totalorder %s20, 0
      %p94 = por %p92, %p93
      %s95 = ssub.s32 %s14, %s21
      %p96 = scmp.eq.s32.totalorder %s95, 0
      %s98 = sadd.s32 %s97, 1
      %s99 = scalar_select %p96, %s97, %s98
      %p102 = pneg %p96
      %p103 = scmp.eq.s32.totalorder %s14, 3
      %p104 = por %p102, %p103
      %p105 = scmp.ne.s32.totalorder %s97, %s100
      %p106 = scmp.eq.s32.totalorder %s14, 0
      %p107 = por %p105, %p106
      %p108 = scmp.ne.s32.totalorder %s97, %s100
      %p109 = scmp.eq.s32.totalorder %s19, 3
      %p110 = por %p108, %p109
      %p111 = scmp.ne.s32.totalorder %s100, %s101
      %p112 = scmp.eq.s32.totalorder %s19, 0
      %p113 = por %p111, %p112
      %p114 = scmp.ne.s32.totalorder %s100, %s101
      %p115 = scmp.eq.s32.totalorder %s20, 3
      %p116 = por %p114, %p115
      %p118 = scmp.ne.s32.totalorder %s101, %s117
      %p119 = scmp.eq.s32.totalorder %s20, 0
      %p120 = por %p118, %p119
      %s121 = ssub.s32 %s14, %s21
      %p122 = scmp.eq.s32.totalorder %s121, 0
      %s124 = sadd.s32 %s123, 1
      %s125 = scalar_select %p122, %s123, %s124
      %p128 = pneg %p122
      %p129 = scmp.eq.s32.totalorder %s14, 3
      %p130 = por %p128, %p129
      %p131 = scmp.ne.s32.totalorder %s123, %s126
      %p132 = scmp.eq.s32.totalorder %s14, 0
      %p133 = por %p131, %p132
      %p134 = scmp.ne.s32.totalorder %s123, %s126
      %p135 = scmp.eq.s32.totalorder %s19, 3
      %p136 = por %p134, %p135
      %p137 = scmp.ne.s32.totalorder %s126, %s127
      %p138 = scmp.eq.s32.totalorder %s19, 0
      %p139 = por %p137, %p138
      %p140 = scmp.ne.s32.totalorder %s126, %s127
      %p141 = scmp.eq.s32.totalorder %s20, 3
      %p142 = por %p140, %p141
      %p144 = scmp.ne.s32.totalorder %s127, %s143
      %p145 = scmp.eq.s32.totalorder %s20, 0
      %p146 = por %p144, %p145
      %s148 = sadd.s32 %s147, 1
      %p151 = scmp.eq.s32.totalorder %s14, 3
      %p152 = scmp.ne.s32.totalorder %s147, %s149
      %p153 = scmp.eq.s32.totalorder %s14, 0
      %p154 = por %p152, %p153
      %p155 = scmp.ne.s32.totalorder %s147, %s149
      %p156 = scmp.eq.s32.totalorder %s19, 3
      %p157 = por %p155, %p156
      %p158 = scmp.ne.s32.totalorder %s149, %s150
      %p159 = scmp.eq.s32.totalorder %s19, 0
      %p160 = por %p158, %p159
      %p161 = scmp.ne.s32.totalorder %s149, %s150
      %p162 = scmp.eq.s32.totalorder %s20, 3
      %p163 = por %p161, %p162
      %p165 = scmp.ne.s32.totalorder %s150, %s164
      %p166 = scmp.eq.s32.totalorder %s20, 0
      %p167 = por %p165, %p166
      %p168 = scmp.le.s32.totalorder 1, %s14
      %p169 = scmp.lt.s32.totalorder %s14, 5
      %p170 = pnand %p168, %p169
      %p171 = pneg %p170
      // Predicated region
      $region9: #{brain_network_forward.5} parent=5 // pred_check
        _
      $region10: #{brain_network_forward.5} parent=5 // pred_check_branch
        %173 = sbr.rel (%p170) target = $region12
      $region11: #{brain_network_forward.5} parent=5 // pred_region
        %s174 = ssub.s32 %s14, 1
        // Predicated region
        $region13: #{brain_network_forward.5} parent=11 // pred_check
          %p175 = pneg %p35
        $region14: #{brain_network_forward.5} parent=11 // pred_check_branch
          %177 = sbr.rel (%p175) target = $region16
        $region15: #{brain_network_forward.5} parent=11 // pred_region
          _
        $region16: #{brain_network_forward.5} parent=11 // pred_fallthru
          _
      $region12: #{brain_network_forward.5} parent=5 // pred_fallthru
        _
      %p178 = scmp.lt.s32.totalorder %s14, 4
      // Predicated region
      $region17: #{brain_network_forward.5} parent=5 // pred_check
        %p179 = pneg %p178
      $region18: #{brain_network_forward.5} parent=5 // pred_check_branch
        %181 = sbr.rel (%p179) target = $region20
      $region19: #{brain_network_forward.5} parent=5 // pred_region
        // Predicated region
        $region21: #{brain_network_forward.5} parent=19 // pred_check
          %p182 = pneg %p55
        $region22: #{brain_network_forward.5} parent=19 // pred_check_branch
          %184 = sbr.rel (%p182) target = $region24
        $region23: #{brain_network_forward.5} parent=19 // pred_region
          %s185 = sand.u32 %s45, 1
          %s186 = scalar_lea.sflag [#allocation3], %s185
          %s187 = sand.u32 %s45, 1
          %s188 = smul.addr %s187, 256
          %s189 = scalar_lea.vmem [#allocation2], %s188
          %s191 = ssub.s32 4096, 4096
          %192 = vsyncadd %s186, %s191
          %s193 = smul.addr %s14, 64
          %s194 = smul.addr %s193, 64
          %s195 = scalar_lea.hbm %s1, %s194
          %s196 = sshll.u32 %s189, 4
          %s197 = int_to_ptr.vmem [resolvable:$true] %s196
          %202 = dma.hbm_to_vmem [thread:$0]  %s195, 4096, %s197, %s186, 128, 128, 8
        $region24: #{brain_network_forward.5} parent=19 // pred_fallthru
          _
        // Predicated region
        $region25: #{brain_network_forward.5} parent=19 // pred_check
          %p203 = pneg %p81
        $region26: #{brain_network_forward.5} parent=19 // pred_check_branch
          %205 = sbr.rel (%p203) target = $region28
        $region27: #{brain_network_forward.5} parent=19 // pred_region
          %p206 = scmp.lt.s32.totalorder %s14, 3
          %s207 = scalar_select %p206, %s14, 3
          %s208 = smul.addr %s207, 2
          %s209 = scalar_lea.vmem %s2, %s208
        $region28: #{brain_network_forward.5} parent=19 // pred_fallthru
          _
        // Predicated region
        $region29: #{brain_network_forward.5} parent=19 // pred_check
          %p210 = pneg %p107
        $region30: #{brain_network_forward.5} parent=19 // pred_check_branch
          %212 = sbr.rel (%p210) target = $region32
        $region31: #{brain_network_forward.5} parent=19 // pred_region
          %p213 = scmp.lt.s32.totalorder %s14, 3
          %s214 = scalar_select %p213, %s14, 3
          %s215 = smul.addr %s214, 2
          %s216 = scalar_lea.vmem %s3, %s215
        $region32: #{brain_network_forward.5} parent=19 // pred_fallthru
          _
        // Predicated region
        $region33: #{brain_network_forward.5} parent=19 // pred_check
          %p217 = pneg %p133
        $region34: #{brain_network_forward.5} parent=19 // pred_check_branch
          %219 = sbr.rel (%p217) target = $region36
        $region35: #{brain_network_forward.5} parent=19 // pred_region
          %p220 = scmp.lt.s32.totalorder %s14, 3
          %s221 = scalar_select %p220, %s14, 3
          %s222 = smul.addr %s221, 2
          %s223 = scalar_lea.vmem %s4, %s222
        $region36: #{brain_network_forward.5} parent=19 // pred_fallthru
          _
      $region20: #{brain_network_forward.5} parent=5 // pred_fallthru
        _
      %p224 = scmp.le.s32.totalorder 1, %s14
      %p225 = scmp.lt.s32.totalorder %s14, 5
      %p226 = pnand %p224, %p225
      %p227 = pneg %p226
      // Predicated region
      $region37: #{brain_network_forward.5} parent=5 // pred_check
        _
      $region38: #{brain_network_forward.5} parent=5 // pred_check_branch
        %229 = sbr.rel (%p226) target = $region40
      $region39: #{brain_network_forward.5} parent=5 // pred_region
        %s230 = ssub.s32 %s14, 1
        %s231 = sand.u32 %s48, 1
        %s232 = scalar_lea.sflag [#allocation3], %s231
        %s233 = sand.u32 %s48, 1
        %s234 = smul.addr %s233, 256
        %s235 = scalar_lea.vmem [#allocation2], %s234
        // Predicated region
        $region41: #{brain_network_forward.5} parent=39 // pred_check
          %p236 = pneg %p61
        $region42: #{brain_network_forward.5} parent=39 // pred_check_branch
          %238 = sbr.rel (%p236) target = $region44
        $region43: #{brain_network_forward.5} parent=39 // pred_region
          %239 = dma.done %s232, 4096
        $region44: #{brain_network_forward.5} parent=39 // pred_fallthru
          _
        %p240 = pneg %p35
        %p241 = pneg %p32
        %s242 = sand.u32 %s48, 1
        %s243 = scalar_lea.sflag [#allocation3], %s242
        %s244 = sand.u32 %s48, 1
        %s245 = smul.addr %s244, 256
        %s246 = scalar_lea.vmem [#allocation2], %s245
        %p247 = pneg %p61
        %p248 = pneg %p58
        %p249 = scmp.lt.s32.totalorder %s19, 3
        %s250 = scalar_select %p249, %s19, 3
        %s251 = smul.addr %s250, 2
        %s252 = scalar_lea.vmem %s2, %s251
        %p253 = pneg %p87
        %p254 = pneg %p84
        %p255 = scmp.lt.s32.totalorder %s19, 3
        %s256 = scalar_select %p255, %s19, 3
        %s257 = smul.addr %s256, 2
        %s258 = scalar_lea.vmem %s3, %s257
        %p259 = pneg %p113
        %p260 = pneg %p110
        %p261 = scmp.lt.s32.totalorder %s19, 3
        %s262 = scalar_select %p261, %s19, 3
        %s263 = smul.addr %s262, 2
        %s264 = scalar_lea.vmem %s4, %s263
        %p265 = pneg %p139
        %p266 = pneg %p136
        %p267 = pneg %p160
        %p268 = pneg %p157
        %p269 = scmp.lt.s32.totalorder %s19, 3
        %s270 = scalar_select %p269, %s19, 3
        %s271 = smul.addr %s270, 2
        %s272 = scalar_lea.vmem %s2, %s271
        %p273 = scmp.lt.s32.totalorder %s19, 3
        %s274 = scalar_select %p273, %s19, 3
        %s275 = smul.addr %s274, 2
        %s276 = scalar_lea.vmem %s3, %s275
        %p277 = scmp.lt.s32.totalorder %s19, 3
        %s278 = scalar_select %p277, %s19, 3
        %s279 = smul.addr %s278, 2
        %s280 = scalar_lea.vmem %s4, %s279
        %p281 = scmp.eq.s32.totalorder %s19, 0
        // Predicated region
        $region45: #{brain_network_forward.5} parent=39 // pred_check
          %p282 = pneg %p281
        $region46: #{brain_network_forward.5} parent=39 // pred_check_branch
          %284 = sbr.rel (%p282) target = $region48
        $region47: #{brain_network_forward.5} parent=39 // pred_region
          %v285 = vld [vmem:[%s0] sm:$0xff]
          %v286 = vld [vmem:[%s0 + $0x8] sm:$0xff]
          %287 = vst [vmem:[%s5] sm:$0xff] %v285
          %288 = vst [vmem:[%s5 + $0x8] sm:$0xff] %v286
        $region48: #{brain_network_forward.5} parent=39 // pred_fallthru
          _
        %v289 = vld [vmem:[%s5] sm:$0xff]
        %v290 = vld [vmem:[%s5 + $0x8] sm:$0xff]
        %v291 = vld [vmem:[%s235] sm:$0xff]
        %v292 = vld [vmem:[%s235 + $0x8] sm:$0xff]
        %v293 = vld [vmem:[%s235 + $0x10] sm:$0xff]
        %v294 = vld [vmem:[%s235 + $0x18] sm:$0xff]
        %v295 = vld [vmem:[%s235 + $0x20] sm:$0xff]
        %v296 = vld [vmem:[%s235 + $0x28] sm:$0xff]
        %v297 = vld [vmem:[%s235 + $0x30] sm:$0xff]
        %v298 = vld [vmem:[%s235 + $0x38] sm:$0xff]
        %v299 = vld [vmem:[%s235 + $0x40] sm:$0xff]
        %v300 = vld [vmem:[%s235 + $0x48] sm:$0xff]
        %v301 = vld [vmem:[%s235 + $0x50] sm:$0xff]
        %v302 = vld [vmem:[%s235 + $0x58] sm:$0xff]
        %v303 = vld [vmem:[%s235 + $0x60] sm:$0xff]
        %v304 = vld [vmem:[%s235 + $0x68] sm:$0xff]
        %v305 = vld [vmem:[%s235 + $0x70] sm:$0xff]
        %v306 = vld [vmem:[%s235 + $0x78] sm:$0xff]
        %v307 = vld [vmem:[%s235 + $0x80] sm:$0xff]
        %v308 = vld [vmem:[%s235 + $0x88] sm:$0xff]
        %v309 = vld [vmem:[%s235 + $0x90] sm:$0xff]
        %v310 = vld [vmem:[%s235 + $0x98] sm:$0xff]
        %v311 = vld [vmem:[%s235 + $0xa0] sm:$0xff]
        %v312 = vld [vmem:[%s235 + $0xa8] sm:$0xff]
        %v313 = vld [vmem:[%s235 + $0xb0] sm:$0xff]
        %v314 = vld [vmem:[%s235 + $0xb8] sm:$0xff]
        %v315 = vld [vmem:[%s235 + $0xc0] sm:$0xff]
        %v316 = vld [vmem:[%s235 + $0xc8] sm:$0xff]
        %v317 = vld [vmem:[%s235 + $0xd0] sm:$0xff]
        %v318 = vld [vmem:[%s235 + $0xd8] sm:$0xff]
        %v319 = vld [vmem:[%s235 + $0xe0] sm:$0xff]
        %v320 = vld [vmem:[%s235 + $0xe8] sm:$0xff]
        %v321 = vld [vmem:[%s235 + $0xf0] sm:$0xff]
        %v322 = vld [vmem:[%s235 + $0xf8] sm:$0xff]
        %v323 = vpack.c.bf16 %v289, %v289
        %v324 = vpack.c.bf16 %v290, %v290
        %v325 = vld [vmem:[%s272] sm:$0x3]
        %v327 = vlaneseq
        %v328 = vshrl.u32 %v327, 7
        %v329 = vsub.s32 0, %v328
        %v330 = vrot.slane %v325, %v329
        %v331 = vlaneseq
        %v332 = vshrl.u32 %v331, 7
        %v333 = vsub.s32 1, %v332
        %v334 = vrot.slane %v325, %v333
        %v369 = vunpack.c.l.b16 %v291
        %v370 = vunpack.c.h.b16 %v291
        %v371 = vunpack.c.l.b16 %v292
        %v372 = vunpack.c.h.b16 %v292
        %v373 = vunpack.c.l.b16 %v293
        %v374 = vunpack.c.h.b16 %v293
        %v375 = vunpack.c.l.b16 %v294
        %v376 = vunpack.c.h.b16 %v294
        %v377 = vunpack.c.l.b16 %v295
        %v378 = vunpack.c.h.b16 %v295
        %v379 = vunpack.c.l.b16 %v296
        %v380 = vunpack.c.h.b16 %v296
        %v381 = vunpack.c.l.b16 %v297
        %v382 = vunpack.c.h.b16 %v297
        %v383 = vunpack.c.l.b16 %v298
        %v384 = vunpack.c.h.b16 %v298
        %v385 = vunpack.c.l.b16 %v299
        %v386 = vunpack.c.h.b16 %v299
        %v387 = vunpack.c.l.b16 %v300
        %v388 = vunpack.c.h.b16 %v300
        %v389 = vunpack.c.l.b16 %v301
        %v390 = vunpack.c.h.b16 %v301
        %v391 = vunpack.c.l.b16 %v302
        %v392 = vunpack.c.h.b16 %v302
        %v393 = vunpack.c.l.b16 %v303
        %v394 = vunpack.c.h.b16 %v303
        %v395 = vunpack.c.l.b16 %v304
        %v396 = vunpack.c.h.b16 %v304
        %v397 = vunpack.c.l.b16 %v305
        %v398 = vunpack.c.h.b16 %v305
        %v399 = vunpack.c.l.b16 %v306
        %v400 = vunpack.c.h.b16 %v306
        %v401 = vunpack.c.l.b16 %v307
        %v402 = vunpack.c.h.b16 %v307
        %v403 = vunpack.c.l.b16 %v308
        %v404 = vunpack.c.h.b16 %v308
        %v405 = vunpack.c.l.b16 %v309
        %v406 = vunpack.c.h.b16 %v309
        %v407 = vunpack.c.l.b16 %v310
        %v408 = vunpack.c.h.b16 %v310
        %v409 = vunpack.c.l.b16 %v311
        %v410 = vunpack.c.h.b16 %v311
        %v411 = vunpack.c.l.b16 %v312
        %v412 = vunpack.c.h.b16 %v312
        %v413 = vunpack.c.l.b16 %v313
        %v414 = vunpack.c.h.b16 %v313
        %v415 = vunpack.c.l.b16 %v314
        %v416 = vunpack.c.h.b16 %v314
        %v417 = vunpack.c.l.b16 %v315
        %v418 = vunpack.c.h.b16 %v315
        %v419 = vunpack.c.l.b16 %v316
        %v420 = vunpack.c.h.b16 %v316
        %v421 = vunpack.c.l.b16 %v317
        %v422 = vunpack.c.h.b16 %v317
        %v423 = vunpack.c.l.b16 %v318
        %v424 = vunpack.c.h.b16 %v318
        %v425 = vunpack.c.l.b16 %v319
        %v426 = vunpack.c.h.b16 %v319
        %v427 = vunpack.c.l.b16 %v320
        %v428 = vunpack.c.h.b16 %v320
        %v429 = vunpack.c.l.b16 %v321
        %v430 = vunpack.c.h.b16 %v321
        %v431 = vunpack.c.l.b16 %v322
        %v432 = vunpack.c.h.b16 %v322
        %v433 = vpack.c.b16 %v371, %v369
        %v434 = vpack.c.b16 %v372, %v370
        %v435 = vpack.c.b16 %v375, %v373
        %v436 = vpack.c.b16 %v376, %v374
        %v437 = vpack.c.b16 %v379, %v377
        %v438 = vpack.c.b16 %v380, %v378
        %v439 = vpack.c.b16 %v383, %v381
        %v440 = vpack.c.b16 %v384, %v382
        %v441 = vpack.c.b16 %v387, %v385
        %v442 = vpack.c.b16 %v388, %v386
        %v443 = vpack.c.b16 %v391, %v389
        %v444 = vpack.c.b16 %v392, %v390
        %v445 = vpack.c.b16 %v395, %v393
        %v446 = vpack.c.b16 %v396, %v394
        %v447 = vpack.c.b16 %v399, %v397
        %v448 = vpack.c.b16 %v400, %v398
        %v449 = vpack.c.b16 %v403, %v401
        %v450 = vpack.c.b16 %v404, %v402
        %v451 = vpack.c.b16 %v407, %v405
        %v452 = vpack.c.b16 %v408, %v406
        %v453 = vpack.c.b16 %v411, %v409
        %v454 = vpack.c.b16 %v412, %v410
        %v455 = vpack.c.b16 %v415, %v413
        %v456 = vpack.c.b16 %v416, %v414
        %v457 = vpack.c.b16 %v419, %v417
        %v458 = vpack.c.b16 %v420, %v418
        %v459 = vpack.c.b16 %v423, %v421
        %v460 = vpack.c.b16 %v424, %v422
        %v461 = vpack.c.b16 %v427, %v425
        %v462 = vpack.c.b16 %v428, %v426
        %v463 = vpack.c.b16 %v431, %v429
        %v464 = vpack.c.b16 %v432, %v430
        %497 = vmatprep.subr.bf16.mxu0 %v434
        %498 = vmatpush1.bf16.msra.mxu0 %v433
        %499 = vmatprep.subr.bf16.mxu0 %v436
        %500 = vmatpush1.bf16.msra.mxu0 %v435
        %501 = vmatprep.subr.bf16.mxu0 %v438
        %502 = vmatpush1.bf16.msra.mxu0 %v437
        %503 = vmatprep.subr.bf16.mxu0 %v440
        %504 = vmatpush1.bf16.msra.mxu0 %v439
        %505 = vmatprep.subr.bf16.mxu0 %v442
        %506 = vmatpush1.bf16.msra.mxu0 %v441
        %507 = vmatprep.subr.bf16.mxu0 %v444
        %508 = vmatpush1.bf16.msra.mxu0 %v443
        %509 = vmatprep.subr.bf16.mxu0 %v446
        %510 = vmatpush1.bf16.msra.mxu0 %v445
        %511 = vmatprep.subr.bf16.mxu0 %v448
        %512 = vmatpush1.bf16.msra.mxu0 %v447
        %513 = vmatprep.subr.bf16.mxu0 %v450
        %514 = vmatpush1.bf16.msra.mxu0 %v449
        %515 = vmatprep.subr.bf16.mxu0 %v452
        %516 = vmatpush1.bf16.msra.mxu0 %v451
        %517 = vmatprep.subr.bf16.mxu0 %v454
        %518 = vmatpush1.bf16.msra.mxu0 %v453
        %519 = vmatprep.subr.bf16.mxu0 %v456
        %520 = vmatpush1.bf16.msra.mxu0 %v455
        %521 = vmatprep.subr.bf16.mxu0 %v458
        %522 = vmatpush1.bf16.msra.mxu0 %v457
        %523 = vmatprep.subr.bf16.mxu0 %v460
        %524 = vmatpush1.bf16.msra.mxu0 %v459
        %525 = vmatprep.subr.bf16.mxu0 %v462
        %526 = vmatpush1.bf16.msra.mxu0 %v461
        %527 = vmatprep.subr.bf16.mxu0 %v464
        %528 = vmatpush1.bf16.msra.mxu0 %v463
        %529 = vmatprep.mubr.bf16.mxu0 %v324
        %530 = vmatmul.mubr.bf16.gmra.mrb[0].mxu0 %v323
        %v531 = vpop.f32.mrb[0].mxu0
        %v532 = vadd.f32 %v330, %v531
        %v533 = vpop.f32.mrb[0].mxu0
        %v534 = vadd.f32 %v334, %v533
        %v535 = vpop.f32.mrb[0].mxu0
        %v536 = vpop.f32.mrb[0].mxu0
        %537 = vdwg.mxu0
        %v538 = vld [vmem:[%s276] sm:$0x3]
        %v539 = vld [vmem:[%s280] sm:$0x3]
        %v540 = vadd.f32 %v532, %v534
        %541 = vadd.xlane.f32.xlu0 %v540
        %v542 = vpop.xlane.xlu0 %541
        %v543 = vrcp.pop 256.0
        %v544 = vmul.f32 %v542, %v543
        %v545 = vsub.f32 %v532, %v544
        %v546 = vsub.f32 %v534, %v544
        %v547 = vmul.f32 %v545, %v545
        %v548 = vmul.f32 %v546, %v546
        %v549 = vadd.f32 %v547, %v548
        %550 = vadd.xlane.f32.xlu0 %v549
        %v551 = vpop.xlane.xlu0 %550
        %v552 = vmul.f32 %v551, %v543
        %v553 = vadd.f32 %v552, 1e-05
        %v554 = vrsqrt.pop %v553
        %v555 = vmul.f32 %v545, %v554
        %v556 = vmul.f32 %v546, %v554
        %v558 = vlaneseq
        %v559 = vshrl.u32 %v558, 7
        %v560 = vsub.s32 0, %v559
        %v561 = vrot.slane %v538, %v560
        %v562 = vlaneseq
        %v563 = vshrl.u32 %v562, 7
        %v564 = vsub.s32 1, %v563
        %v565 = vrot.slane %v538, %v564
        %v568 = vmul.f32 %v555, %v561
        %v569 = vmul.f32 %v556, %v565
        %v571 = vlaneseq
        %v572 = vshrl.u32 %v571, 7
        %v573 = vsub.s32 0, %v572
        %v574 = vrot.slane %v539, %v573
        %v575 = vlaneseq
        %v576 = vshrl.u32 %v575, 7
        %v577 = vsub.s32 1, %v576
        %v578 = vrot.slane %v539, %v577
        %v581 = vadd.f32 %v568, %v574
        %v582 = vadd.f32 %v569, %v578
        %v583 = vmul.f32 %v581, 0.5
        %v584 = vmul.f32 %v582, 0.5
        %v585 = vmul.f32 %v581, 0.70710677
        %v586 = vmul.f32 %v582, 0.70710677
        %v587 = verf.f32.pop %v585
        %v588 = verf.f32.pop %v586
        %v589 = vadd.f32 %v587, 1.0
        %v590 = vadd.f32 %v588, 1.0
        %v591 = vmul.f32 %v583, %v589
        %v592 = vmul.f32 %v584, %v590
        %v593 = vadd.f32 %v591, %v289
        %v594 = vadd.f32 %v592, %v290
        %595 = vst [vmem:[%s5] sm:$0xff] %v593
        %596 = vst [vmem:[%s5 + $0x8] sm:$0xff] %v594
        // Predicated region
        $region49: #{brain_network_forward.5} parent=39 // pred_check
          %p597 = pneg %p157
        $region50: #{brain_network_forward.5} parent=39 // pred_check_branch
          %599 = sbr.rel (%p597) target = $region52
        $region51: #{brain_network_forward.5} parent=39 // pred_region
          _
        $region52: #{brain_network_forward.5} parent=39 // pred_fallthru
          _
        // Predicated region
        $region53: #{brain_network_forward.5} parent=39 // pred_check
          %p600 = pneg %p157
        $region54: #{brain_network_forward.5} parent=39 // pred_check_branch
          %602 = sbr.rel (%p600) target = $region56
        $region55: #{brain_network_forward.5} parent=39 // pred_region
          _
        $region56: #{brain_network_forward.5} parent=39 // pred_fallthru
          _
      $region40: #{brain_network_forward.5} parent=5 // pred_fallthru
        _
      %p603 = scmp.le.s32.totalorder 2, %s14
      // Predicated region
      $region57: #{brain_network_forward.5} parent=5 // pred_check
        %p604 = pneg %p603
      $region58: #{brain_network_forward.5} parent=5 // pred_check_branch
        %606 = sbr.rel (%p604) target = $region60
      $region59: #{brain_network_forward.5} parent=5 // pred_region
        %s607 = ssub.s32 %s14, 2
      $region60: #{brain_network_forward.5} parent=5 // pred_fallthru
        _
    $region6: #{brain_network_forward.5} parent=1 // loop_footer
      %s18 = sadd.s32 1, %s14
    $region7: #{brain_network_forward.5} parent=1 // loop_footer_branch
      %13 = sbr.rel target = $region3
    $region8: #{brain_network_forward.5} parent=1 // loop_exit
      _
    %608 = vsyncpa [#allocation3], 1
    %s609 = scalar_lea.sflag [#allocation3], 1
    %610 = vsyncpa %s609, 1

// kernel: brain_network_forward.4
$region0: #{brain_network_forward.4}
  #allocation0 [shape = 'u32[]', space=smem, size = 0x4, offset = 0x4, fixed_abs, tag = 'smem constant byte address 0x4 - core index']
  #allocation1 [shape = 'u32[144,128]{1,0:T(1,128)}', space=vmem, size = 0x12000, scoped, tag = 'internal scratch']
  %s0 = inlined_call_operand.vmem [shape: f32[8,512], index: 0, kind: input, shape index: {}]
  %s1 = inlined_call_operand.hbm [shape: bf16[512,256], index: 1, kind: input, shape index: {}]
  %s2 = inlined_call_operand.vmem [shape: f32[1,256], index: 2, kind: input, shape index: {}]
  %s3 = inlined_call_operand.vmem [shape: f32[1,256], index: 3, kind: input, shape index: {}]
  %s4 = inlined_call_operand.vmem [shape: f32[1,256], index: 4, kind: input, shape index: {}]
  %s5 = inlined_call_operand.vmem [shape: f32[8,256], index: 5, kind: output, shape index: {}]
  %s6 = sld [smem:[#allocation0]]
  $region42: #{brain_network_forward.4} parent=0
    _
  %s8 = ssub.s32 1, %s6
  %s9 = scalar_select 0, %s8, %s6
  $region1: #{brain_network_forward.4} parent=0
    #allocation2 [shape = 'u8[262144]{0}', space=vmem, size = 0x40000, scoped, tag = 'input window, operand 1, single buffered']
    #allocation3 [shape = 's32[1]{0}', space=sflag, size = 0x4, scoped, tag = 'scoped memory for brain_network_forward.4']
    %10 = vsyncpa [#allocation3], 0
    // Predicated region
    $region2: #{brain_network_forward.4} parent=1 // pred_check
      _
    $region3: #{brain_network_forward.4} parent=1 // pred_check_branch
      %12 = sbr.rel (0) target = $region5
    $region4: #{brain_network_forward.4} parent=1 // pred_region
      _
    $region5: #{brain_network_forward.4} parent=1 // pred_fallthru
      _
    // Predicated region
    $region6: #{brain_network_forward.4} parent=1 // pred_check
      _
    $region7: #{brain_network_forward.4} parent=1 // pred_check_branch
      %14 = sbr.rel (0) target = $region9
    $region8: #{brain_network_forward.4} parent=1 // pred_region
      %s16 = ssub.s32 8192, 8192
      %17 = vsyncadd [#allocation3], %s16
      %s18 = sshll.u32 [#allocation2], 4
      %s19 = int_to_ptr.vmem [resolvable:$true] %s18
      %24 = dma.hbm_to_vmem [thread:$0]  %s1, 8192, %s19, [#allocation3], 128, 128, 8
    $region9: #{brain_network_forward.4} parent=1 // pred_fallthru
      _
    // Predicated region
    $region10: #{brain_network_forward.4} parent=1 // pred_check
      _
    $region11: #{brain_network_forward.4} parent=1 // pred_check_branch
      %26 = sbr.rel (0) target = $region13
    $region12: #{brain_network_forward.4} parent=1 // pred_region
      _
    $region13: #{brain_network_forward.4} parent=1 // pred_fallthru
      _
    // Predicated region
    $region14: #{brain_network_forward.4} parent=1 // pred_check
      _
    $region15: #{brain_network_forward.4} parent=1 // pred_check_branch
      %28 = sbr.rel (0) target = $region17
    $region16: #{brain_network_forward.4} parent=1 // pred_region
      _
    $region17: #{brain_network_forward.4} parent=1 // pred_fallthru
      _
    // Predicated region
    $region18: #{brain_network_forward.4} parent=1 // pred_check
      _
    $region19: #{brain_network_forward.4} parent=1 // pred_check_branch
      %30 = sbr.rel (0) target = $region21
    $region20: #{brain_network_forward.4} parent=1 // pred_region
      _
    $region21: #{brain_network_forward.4} parent=1 // pred_fallthru
      _
    // Predicated region
    $region22: #{brain_network_forward.4} parent=1 // pred_check
      _
    $region23: #{brain_network_forward.4} parent=1 // pred_check_branch
      %32 = sbr.rel (0) target = $region25
    $region24: #{brain_network_forward.4} parent=1 // pred_region
      %33 = dma.done [#allocation3], 8192
    $region25: #{brain_network_forward.4} parent=1 // pred_fallthru
      _
    %p34 = scmp.eq.s32.totalorder 0, 0
    // Predicated region
    $region26: #{brain_network_forward.4} parent=1 // pred_check
      %p35 = pneg %p34
    $region27: #{brain_network_forward.4} parent=1 // pred_check_branch
      %37 = sbr.rel (%p35) target = $region29
    $region28: #{brain_network_forward.4} parent=1 // pred_region
      %38 = vst [vmem:[%s5] sm:$0xff] 0.0
      %39 = vst [vmem:[%s5 + $0x8] sm:$0xff] 0.0
    $region29: #{brain_network_forward.4} parent=1 // pred_fallthru
      _
    %s40 = smul.u32 0, 512
    %v41 = vld [vmem:[%s5] sm:$0xff]
    %v42 = vld [vmem:[%s5 + $0x8] sm:$0xff]
    %s43 = sshra.s32 %s40, 7
    %s44 = sand.u32 %s40, 127
    %s45 = smul.addr %s43, 8
    %s46 = scalar_lea.vmem %s0, %s45
    %v47 = vld [vmem:[%s46] sm:$0xff]
    %v48 = vld [vmem:[%s46 + $0x8] sm:$0xff]
    %v49 = vld [vmem:[%s46 + $0x10] sm:$0xff]
    %v50 = vld [vmem:[%s46 + $0x18] sm:$0xff]
    %v51 = vld [vmem:[#allocation2] sm:$0xff]
    %v52 = vld [vmem:[#allocation2 + $0x8] sm:$0xff]
    %v53 = vld [vmem:[#allocation2 + $0x10] sm:$0xff]
    %v54 = vld [vmem:[#allocation2 + $0x18] sm:$0xff]
    %v55 = vld [vmem:[#allocation2 + $0x20] sm:$0xff]
    %v56 = vld [vmem:[#allocation2 + $0x28] sm:$0xff]
    %v57 = vld [vmem:[#allocation2 + $0x30] sm:$0xff]
    %v58 = vld [vmem:[#allocation2 + $0x38] sm:$0xff]
    %v59 = vld [vmem:[#allocation2 + $0x40] sm:$0xff]
    %v60 = vld [vmem:[#allocation2 + $0x48] sm:$0xff]
    %v61 = vld [vmem:[#allocation2 + $0x50] sm:$0xff]
    %v62 = vld [vmem:[#allocation2 + $0x58] sm:$0xff]
    %v63 = vld [vmem:[#allocation2 + $0x60] sm:$0xff]
    %v64 = vld [vmem:[#allocation2 + $0x68] sm:$0xff]
    %v65 = vld [vmem:[#allocation2 + $0x70] sm:$0xff]
    %v66 = vld [vmem:[#allocation2 + $0x78] sm:$0xff]
    %v67 = vld [vmem:[#allocation2 + $0x80] sm:$0xff]
    %v68 = vld [vmem:[#allocation2 + $0x88] sm:$0xff]
    %v69 = vld [vmem:[#allocation2 + $0x90] sm:$0xff]
    %v70 = vld [vmem:[#allocation2 + $0x98] sm:$0xff]
    %v71 = vld [vmem:[#allocation2 + $0xa0] sm:$0xff]
    %v72 = vld [vmem:[#allocation2 + $0xa8] sm:$0xff]
    %v73 = vld [vmem:[#allocation2 + $0xb0] sm:$0xff]
    %v74 = vld [vmem:[#allocation2 + $0xb8] sm:$0xff]
    %v75 = vld [vmem:[#allocation2 + $0xc0] sm:$0xff]
    %v76 = vld [vmem:[#allocation2 + $0xc8] sm:$0xff]
    %v77 = vld [vmem:[#allocation2 + $0xd0] sm:$0xff]
    %v78 = vld [vmem:[#allocation2 + $0xd8] sm:$0xff]
    %v79 = vld [vmem:[#allocation2 + $0xe0] sm:$0xff]
    %v80 = vld [vmem:[#allocation2 + $0xe8] sm:$0xff]
    %v81 = vld [vmem:[#allocation2 + $0xf0] sm:$0xff]
    %v82 = vld [vmem:[#allocation2 + $0xf8] sm:$0xff]
    %v83 = vld [vmem:[#allocation2 + $0x100] sm:$0xff]
    %v84 = vld [vmem:[#allocation2 + $0x108] sm:$0xff]
    %v85 = vld [vmem:[#allocation2 + $0x110] sm:$0xff]
    %v86 = vld [vmem:[#allocation2 + $0x118] sm:$0xff]
    %v87 = vld [vmem:[#allocation2 + $0x120] sm:$0xff]
    %v88 = vld [vmem:[#allocation2 + $0x128] sm:$0xff]
    %v89 = vld [vmem:[#allocation2 + $0x130] sm:$0xff]
    %v90 = vld [vmem:[#allocation2 + $0x138] sm:$0xff]
    %v91 = vld [vmem:[#allocation2 + $0x140] sm:$0xff]
    %v92 = vld [vmem:[#allocation2 + $0x148] sm:$0xff]
    %v93 = vld [vmem:[#allocation2 + $0x150] sm:$0xff]
    %v94 = vld [vmem:[#allocation2 + $0x158] sm:$0xff]
    %v95 = vld [vmem:[#allocation2 + $0x160] sm:$0xff]
    %v96 = vld [vmem:[#allocation2 + $0x168] sm:$0xff]
    %v97 = vld [vmem:[#allocation2 + $0x170] sm:$0xff]
    %v98 = vld [vmem:[#allocation2 + $0x178] sm:$0xff]
    %v99 = vld [vmem:[#allocation2 + $0x180] sm:$0xff]
    %v100 = vld [vmem:[#allocation2 + $0x188] sm:$0xff]
    %v101 = vld [vmem:[#allocation2 + $0x190] sm:$0xff]
    %v102 = vld [vmem:[#allocation2 + $0x198] sm:$0xff]
    %v103 = vld [vmem:[#allocation2 + $0x1a0] sm:$0xff]
    %v104 = vld [vmem:[#allocation2 + $0x1a8] sm:$0xff]
    %v105 = vld [vmem:[#allocation2 + $0x1b0] sm:$0xff]
    %v106 = vld [vmem:[#allocation2 + $0x1b8] sm:$0xff]
    %v107 = vld [vmem:[#allocation2 + $0x1c0] sm:$0xff]
    %v108 = vld [vmem:[#allocation2 + $0x1c8] sm:$0xff]
    %v109 = vld [vmem:[#allocation2 + $0x1d0] sm:$0xff]
    %v110 = vld [vmem:[#allocation2 + $0x1d8] sm:$0xff]
    %v111 = vld [vmem:[#allocation2 + $0x1e0] sm:$0xff]
    %v112 = vld [vmem:[#allocation2 + $0x1e8] sm:$0xff]
    %v113 = vld [vmem:[#allocation2 + $0x1f0] sm:$0xff]
    %v114 = vld [vmem:[#allocation2 + $0x1f8] sm:$0xff]
    %v115 = vpack.c.bf16 %v47, %v47
    %v116 = vpack.c.bf16 %v48, %v48
    %v117 = vpack.c.bf16 %v49, %v49
    %v118 = vpack.c.bf16 %v50, %v50
    %v183 = vunpack.c.l.b16 %v51
    %v184 = vunpack.c.h.b16 %v51
    %v185 = vunpack.c.l.b16 %v52
    %v186 = vunpack.c.h.b16 %v52
    %v187 = vunpack.c.l.b16 %v53
    %v188 = vunpack.c.h.b16 %v53
    %v189 = vunpack.c.l.b16 %v54
    %v190 = vunpack.c.h.b16 %v54
    %v191 = vunpack.c.l.b16 %v55
    %v192 = vunpack.c.h.b16 %v55
    %v193 = vunpack.c.l.b16 %v56
    %v194 = vunpack.c.h.b16 %v56
    %v195 = vunpack.c.l.b16 %v57
    %v196 = vunpack.c.h.b16 %v57
    %v197 = vunpack.c.l.b16 %v58
    %v198 = vunpack.c.h.b16 %v58
    %v199 = vunpack.c.l.b16 %v59
    %v200 = vunpack.c.h.b16 %v59
    %v201 = vunpack.c.l.b16 %v60
    %v202 = vunpack.c.h.b16 %v60
    %v203 = vunpack.c.l.b16 %v61
    %v204 = vunpack.c.h.b16 %v61
    %v205 = vunpack.c.l.b16 %v62
    %v206 = vunpack.c.h.b16 %v62
    %v207 = vunpack.c.l.b16 %v63
    %v208 = vunpack.c.h.b16 %v63
    %v209 = vunpack.c.l.b16 %v64
    %v210 = vunpack.c.h.b16 %v64
    %v211 = vunpack.c.l.b16 %v65
    %v212 = vunpack.c.h.b16 %v65
    %v213 = vunpack.c.l.b16 %v66
    %v214 = vunpack.c.h.b16 %v66
    %v215 = vunpack.c.l.b16 %v67
    %v216 = vunpack.c.h.b16 %v67
    %v217 = vunpack.c.l.b16 %v68
    %v218 = vunpack.c.h.b16 %v68
    %v219 = vunpack.c.l.b16 %v69
    %v220 = vunpack.c.h.b16 %v69
    %v221 = vunpack.c.l.b16 %v70
    %v222 = vunpack.c.h.b16 %v70
    %v223 = vunpack.c.l.b16 %v71
    %v224 = vunpack.c.h.b16 %v71
    %v225 = vunpack.c.l.b16 %v72
    %v226 = vunpack.c.h.b16 %v72
    %v227 = vunpack.c.l.b16 %v73
    %v228 = vunpack.c.h.b16 %v73
    %v229 = vunpack.c.l.b16 %v74
    %v230 = vunpack.c.h.b16 %v74
    %v231 = vunpack.c.l.b16 %v75
    %v232 = vunpack.c.h.b16 %v75
    %v233 = vunpack.c.l.b16 %v76
    %v234 = vunpack.c.h.b16 %v76
    %v235 = vunpack.c.l.b16 %v77
    %v236 = vunpack.c.h.b16 %v77
    %v237 = vunpack.c.l.b16 %v78
    %v238 = vunpack.c.h.b16 %v78
    %v239 = vunpack.c.l.b16 %v79
    %v240 = vunpack.c.h.b16 %v79
    %v241 = vunpack.c.l.b16 %v80
    %v242 = vunpack.c.h.b16 %v80
    %v243 = vunpack.c.l.b16 %v81
    %v244 = vunpack.c.h.b16 %v81
    %v245 = vunpack.c.l.b16 %v82
    %v246 = vunpack.c.h.b16 %v82
    %v247 = vunpack.c.l.b16 %v83
    %v248 = vunpack.c.h.b16 %v83
    %v249 = vunpack.c.l.b16 %v84
    %v250 = vunpack.c.h.b16 %v84
    %v251 = vunpack.c.l.b16 %v85
    %v252 = vunpack.c.h.b16 %v85
    %v253 = vunpack.c.l.b16 %v86
    %v254 = vunpack.c.h.b16 %v86
    %v255 = vunpack.c.l.b16 %v87
    %v256 = vunpack.c.h.b16 %v87
    %v257 = vunpack.c.l.b16 %v88
    %v258 = vunpack.c.h.b16 %v88
    %v259 = vunpack.c.l.b16 %v89
    %v260 = vunpack.c.h.b16 %v89
    %v261 = vunpack.c.l.b16 %v90
    %v262 = vunpack.c.h.b16 %v90
    %v263 = vunpack.c.l.b16 %v91
    %v264 = vunpack.c.h.b16 %v91
    %v265 = vunpack.c.l.b16 %v92
    %v266 = vunpack.c.h.b16 %v92
    %v267 = vunpack.c.l.b16 %v93
    %v268 = vunpack.c.h.b16 %v93
    %v269 = vunpack.c.l.b16 %v94
    %v270 = vunpack.c.h.b16 %v94
    %v271 = vunpack.c.l.b16 %v95
    %v272 = vunpack.c.h.b16 %v95
    %v273 = vunpack.c.l.b16 %v96
    %v274 = vunpack.c.h.b16 %v96
    %v275 = vunpack.c.l.b16 %v97
    %v276 = vunpack.c.h.b16 %v97
    %v277 = vunpack.c.l.b16 %v98
    %v278 = vunpack.c.h.b16 %v98
    %v279 = vunpack.c.l.b16 %v99
    %v280 = vunpack.c.h.b16 %v99
    %v281 = vunpack.c.l.b16 %v100
    %v282 = vunpack.c.h.b16 %v100
    %v283 = vunpack.c.l.b16 %v101
    %v284 = vunpack.c.h.b16 %v101
    %v285 = vunpack.c.l.b16 %v102
    %v286 = vunpack.c.h.b16 %v102
    %v287 = vunpack.c.l.b16 %v103
    %v288 = vunpack.c.h.b16 %v103
    %v289 = vunpack.c.l.b16 %v104
    %v290 = vunpack.c.h.b16 %v104
    %v291 = vunpack.c.l.b16 %v105
    %v292 = vunpack.c.h.b16 %v105
    %v293 = vunpack.c.l.b16 %v106
    %v294 = vunpack.c.h.b16 %v106
    %v295 = vunpack.c.l.b16 %v107
    %v296 = vunpack.c.h.b16 %v107
    %v297 = vunpack.c.l.b16 %v108
    %v298 = vunpack.c.h.b16 %v108
    %v299 = vunpack.c.l.b16 %v109
    %v300 = vunpack.c.h.b16 %v109
    %v301 = vunpack.c.l.b16 %v110
    %v302 = vunpack.c.h.b16 %v110
    %v303 = vunpack.c.l.b16 %v111
    %v304 = vunpack.c.h.b16 %v111
    %v305 = vunpack.c.l.b16 %v112
    %v306 = vunpack.c.h.b16 %v112
    %v307 = vunpack.c.l.b16 %v113
    %v308 = vunpack.c.h.b16 %v113
    %v309 = vunpack.c.l.b16 %v114
    %v310 = vunpack.c.h.b16 %v114
    %v311 = vpack.c.b16 %v185, %v183
    %v312 = vpack.c.b16 %v186, %v184
    %v313 = vpack.c.b16 %v189, %v187
    %v314 = vpack.c.b16 %v190, %v188
    %v315 = vpack.c.b16 %v193, %v191
    %v316 = vpack.c.b16 %v194, %v192
    %v317 = vpack.c.b16 %v197, %v195
    %v318 = vpack.c.b16 %v198, %v196
    %v319 = vpack.c.b16 %v201, %v199
    %v320 = vpack.c.b16 %v202, %v200
    %v321 = vpack.c.b16 %v205, %v203
    %v322 = vpack.c.b16 %v206, %v204
    %v323 = vpack.c.b16 %v209, %v207
    %v324 = vpack.c.b16 %v210, %v208
    %v325 = vpack.c.b16 %v213, %v211
    %v326 = vpack.c.b16 %v214, %v212
    %v327 = vpack.c.b16 %v217, %v215
    %v328 = vpack.c.b16 %v218, %v216
    %v329 = vpack.c.b16 %v221, %v219
    %v330 = vpack.c.b16 %v222, %v220
    %v331 = vpack.c.b16 %v225, %v223
    %v332 = vpack.c.b16 %v226, %v224
    %v333 = vpack.c.b16 %v229, %v227
    %v334 = vpack.c.b16 %v230, %v228
    %v335 = vpack.c.b16 %v233, %v231
    %v336 = vpack.c.b16 %v234, %v232
    %v337 = vpack.c.b16 %v237, %v235
    %v338 = vpack.c.b16 %v238, %v236
    %v339 = vpack.c.b16 %v241, %v239
    %v340 = vpack.c.b16 %v242, %v240
    %v341 = vpack.c.b16 %v245, %v243
    %v342 = vpack.c.b16 %v246, %v244
    %v343 = vpack.c.b16 %v249, %v247
    %v344 = vpack.c.b16 %v250, %v248
    %v345 = vpack.c.b16 %v253, %v251
    %v346 = vpack.c.b16 %v254, %v252
    %v347 = vpack.c.b16 %v257, %v255
    %v348 = vpack.c.b16 %v258, %v256
    %v349 = vpack.c.b16 %v261, %v259
    %v350 = vpack.c.b16 %v262, %v260
    %v351 = vpack.c.b16 %v265, %v263
    %v352 = vpack.c.b16 %v266, %v264
    %v353 = vpack.c.b16 %v269, %v267
    %v354 = vpack.c.b16 %v270, %v268
    %v355 = vpack.c.b16 %v273, %v271
    %v356 = vpack.c.b16 %v274, %v272
    %v357 = vpack.c.b16 %v277, %v275
    %v358 = vpack.c.b16 %v278, %v276
    %v359 = vpack.c.b16 %v281, %v279
    %v360 = vpack.c.b16 %v282, %v280
    %v361 = vpack.c.b16 %v285, %v283
    %v362 = vpack.c.b16 %v286, %v284
    %v363 = vpack.c.b16 %v289, %v287
    %v364 = vpack.c.b16 %v290, %v288
    %v365 = vpack.c.b16 %v293, %v291
    %v366 = vpack.c.b16 %v294, %v292
    %v367 = vpack.c.b16 %v297, %v295
    %v368 = vpack.c.b16 %v298, %v296
    %v369 = vpack.c.b16 %v301, %v299
    %v370 = vpack.c.b16 %v302, %v300
    %v371 = vpack.c.b16 %v305, %v303
    %v372 = vpack.c.b16 %v306, %v304
    %v373 = vpack.c.b16 %v309, %v307
    %v374 = vpack.c.b16 %v310, %v308
    %439 = vmatprep.subr.bf16.mxu0 %v312
    %440 = vmatpush1.bf16.msra.mxu0 %v311
    %441 = vmatprep.subr.bf16.mxu0 %v314
    %442 = vmatpush1.bf16.msra.mxu0 %v313
    %443 = vmatprep.subr.bf16.mxu0 %v316
    %444 = vmatpush1.bf16.msra.mxu0 %v315
    %445 = vmatprep.subr.bf16.mxu0 %v318
    %446 = vmatpush1.bf16.msra.mxu0 %v317
    %447 = vmatprep.subr.bf16.mxu0 %v320
    %448 = vmatpush1.bf16.msra.mxu0 %v319
    %449 = vmatprep.subr.bf16.mxu0 %v322
    %450 = vmatpush1.bf16.msra.mxu0 %v321
    %451 = vmatprep.subr.bf16.mxu0 %v324
    %452 = vmatpush1.bf16.msra.mxu0 %v323
    %453 = vmatprep.subr.bf16.mxu0 %v326
    %454 = vmatpush1.bf16.msra.mxu0 %v325
    %455 = vmatprep.subr.bf16.mxu0 %v328
    %456 = vmatpush1.bf16.msra.mxu0 %v327
    %457 = vmatprep.subr.bf16.mxu0 %v330
    %458 = vmatpush1.bf16.msra.mxu0 %v329
    %459 = vmatprep.subr.bf16.mxu0 %v332
    %460 = vmatpush1.bf16.msra.mxu0 %v331
    %461 = vmatprep.subr.bf16.mxu0 %v334
    %462 = vmatpush1.bf16.msra.mxu0 %v333
    %463 = vmatprep.subr.bf16.mxu0 %v336
    %464 = vmatpush1.bf16.msra.mxu0 %v335
    %465 = vmatprep.subr.bf16.mxu0 %v338
    %466 = vmatpush1.bf16.msra.mxu0 %v337
    %467 = vmatprep.subr.bf16.mxu0 %v340
    %468 = vmatpush1.bf16.msra.mxu0 %v339
    %469 = vmatprep.subr.bf16.mxu0 %v342
    %470 = vmatpush1.bf16.msra.mxu0 %v341
    %471 = vmatprep.mubr.bf16.mxu0 %v116
    %472 = vmatmul.mubr.bf16.gmra.mrb[0].mxu0 %v115
    %v473 = vpop.f32.mrb[0].mxu0
    %v474 = vadd.f32 0.0, %v473
    %v475 = vpop.f32.mrb[0].mxu0
    %v476 = vadd.f32 0.0, %v475
    %v477 = vpop.f32.mrb[0].mxu0
    %v478 = vpop.f32.mrb[0].mxu0
    %479 = vdwg.mxu0
    %480 = vmatprep.subr.bf16.mxu0 %v344
    %481 = vmatpush1.bf16.msra.mxu0 %v343
    %482 = vmatprep.subr.bf16.mxu0 %v346
    %483 = vmatpush1.bf16.msra.mxu0 %v345
    %484 = vmatprep.subr.bf16.mxu0 %v348
    %485 = vmatpush1.bf16.msra.mxu0 %v347
    %486 = vmatprep.subr.bf16.mxu0 %v350
    %487 = vmatpush1.bf16.msra.mxu0 %v349
    %488 = vmatprep.subr.bf16.mxu0 %v352
    %489 = vmatpush1.bf16.msra.mxu0 %v351
    %490 = vmatprep.subr.bf16.mxu0 %v354
    %491 = vmatpush1.bf16.msra.mxu0 %v353
    %492 = vmatprep.subr.bf16.mxu0 %v356
    %493 = vmatpush1.bf16.msra.mxu0 %v355
    %494 = vmatprep.subr.bf16.mxu0 %v358
    %495 = vmatpush1.bf16.msra.mxu0 %v357
    %496 = vmatprep.subr.bf16.mxu0 %v360
    %497 = vmatpush1.bf16.msra.mxu0 %v359
    %498 = vmatprep.subr.bf16.mxu0 %v362
    %499 = vmatpush1.bf16.msra.mxu0 %v361
    %500 = vmatprep.subr.bf16.mxu0 %v364
    %501 = vmatpush1.bf16.msra.mxu0 %v363
    %502 = vmatprep.subr.bf16.mxu0 %v366
    %503 = vmatpush1.bf16.msra.mxu0 %v365
    %504 = vmatprep.subr.bf16.mxu0 %v368
    %505 = vmatpush1.bf16.msra.mxu0 %v367
    %506 = vmatprep.subr.bf16.mxu0 %v370
    %507 = vmatpush1.bf16.msra.mxu0 %v369
    %508 = vmatprep.subr.bf16.mxu0 %v372
    %509 = vmatpush1.bf16.msra.mxu0 %v371
    %510 = vmatprep.subr.bf16.mxu0 %v374
    %511 = vmatpush1.bf16.msra.mxu0 %v373
    %512 = vmatprep.mubr.bf16.mxu0 %v118
    %513 = vmatmul.mubr.bf16.gmra.mrb[0].mxu0 %v117
    %v514 = vpop.f32.mrb[0].mxu0
    %v515 = vadd.f32 %v474, %v514
    %v516 = vpop.f32.mrb[0].mxu0
    %v517 = vadd.f32 %v476, %v516
    %v518 = vpop.f32.mrb[0].mxu0
    %v519 = vpop.f32.mrb[0].mxu0
    %520 = vdwg.mxu0
    %v521 = vadd.f32 %v41, %v515
    %v522 = vadd.f32 %v42, %v517
    %523 = vst [vmem:[%s5] sm:$0xff] %v521
    %524 = vst [vmem:[%s5 + $0x8] sm:$0xff] %v522
    // Predicated region
    $region30: #{brain_network_forward.4} parent=1 // pred_check
      %p525 = pneg %p34
    $region31: #{brain_network_forward.4} parent=1 // pred_check_branch
      %527 = sbr.rel (%p525) target = $region33
    $region32: #{brain_network_forward.4} parent=1 // pred_region
      %v528 = vld [vmem:[%s5] sm:$0xff]
      %v529 = vld [vmem:[%s5 + $0x8] sm:$0xff]
      %v530 = vld [vmem:[%s2] sm:$0x3]
      %v532 = vlaneseq
      %v533 = vshrl.u32 %v532, 7
      %v534 = vsub.s32 0, %v533
      %v535 = vrot.slane %v530, %v534
      %v536 = vlaneseq
      %v537 = vshrl.u32 %v536, 7
      %v538 = vsub.s32 1, %v537
      %v539 = vrot.slane %v530, %v538
      %v542 = vadd.f32 %v528, %v535
      %v543 = vadd.f32 %v529, %v539
      %v544 = vld [vmem:[%s3] sm:$0x3]
      %v545 = vld [vmem:[%s4] sm:$0x3]
      %v546 = vadd.f32 %v542, %v543
      %547 = vadd.xlane.f32.xlu0 %v546
      %v548 = vpop.xlane.xlu0 %547
      %v549 = vrcp.pop 256.0
      %v550 = vmul.f32 %v548, %v549
      %v551 = vsub.f32 %v542, %v550
      %v552 = vsub.f32 %v543, %v550
      %v553 = vmul.f32 %v551, %v551
      %v554 = vmul.f32 %v552, %v552
      %v555 = vadd.f32 %v553, %v554
      %556 = vadd.xlane.f32.xlu0 %v555
      %v557 = vpop.xlane.xlu0 %556
      %v558 = vmul.f32 %v557, %v549
      %v559 = vadd.f32 %v558, 1e-05
      %v560 = vrsqrt.pop %v559
      %v561 = vmul.f32 %v551, %v560
      %v562 = vmul.f32 %v552, %v560
      %v564 = vlaneseq
      %v565 = vshrl.u32 %v564, 7
      %v566 = vsub.s32 0, %v565
      %v567 = vrot.slane %v544, %v566
      %v568 = vlaneseq
      %v569 = vshrl.u32 %v568, 7
      %v570 = vsub.s32 1, %v569
      %v571 = vrot.slane %v544, %v570
      %v574 = vmul.f32 %v561, %v567
      %v575 = vmul.f32 %v562, %v571
      %v577 = vlaneseq
      %v578 = vshrl.u32 %v577, 7
      %v579 = vsub.s32 0, %v578
      %v580 = vrot.slane %v545, %v579
      %v581 = vlaneseq
      %v582 = vshrl.u32 %v581, 7
      %v583 = vsub.s32 1, %v582
      %v584 = vrot.slane %v545, %v583
      %v587 = vadd.f32 %v574, %v580
      %v588 = vadd.f32 %v575, %v584
      %v589 = vmul.f32 %v587, 0.5
      %v590 = vmul.f32 %v588, 0.5
      %v591 = vmul.f32 %v587, 0.70710677
      %v592 = vmul.f32 %v588, 0.70710677
      %v593 = verf.f32.pop %v591
      %v594 = verf.f32.pop %v592
      %v595 = vadd.f32 %v593, 1.0
      %v596 = vadd.f32 %v594, 1.0
      %v597 = vmul.f32 %v589, %v595
      %v598 = vmul.f32 %v590, %v596
      %599 = vst [vmem:[%s5] sm:$0xff] %v597
      %600 = vst [vmem:[%s5 + $0x8] sm:$0xff] %v598
    $region33: #{brain_network_forward.4} parent=1 // pred_fallthru
      _
    // Predicated region
    $region34: #{brain_network_forward.4} parent=1 // pred_check
      _
    $region35: #{brain_network_forward.4} parent=1 // pred_check_branch
      %602 = sbr.rel (0) target = $region37
    $region36: #{brain_network_forward.4} parent=1 // pred_region
      _
    $region37: #{brain_network_forward.4} parent=1 // pred_fallthru
      _
    // Predicated region
    $region38: #{brain_network_forward.4} parent=1 // pred_check
      _
    $region39: #{brain_network_forward.4} parent=1 // pred_check_branch
      %604 = sbr.rel (0) target = $region41
    $region40: #{brain_network_forward.4} parent=1 // pred_region
      _
    $region41: #{brain_network_forward.4} parent=1 // pred_fallthru
      _
    %605 = vsyncpa [#allocation3], 1

// kernel: brain_network_forward.7
$region0: #{brain_network_forward.7}
  #allocation0 [shape = 'u32[]', space=smem, size = 0x4, offset = 0x4, fixed_abs, tag = 'smem constant byte address 0x4 - core index']
  #allocation1 [shape = 'u32[144,128]{1,0:T(1,128)}', space=vmem, size = 0x12000, scoped, tag = 'internal scratch']
  %s0 = inlined_call_operand.vmem [shape: f32[8,128], index: 0, kind: input, shape index: {}]
  %s1 = inlined_call_operand.vmem [shape: f32[1,128], index: 1, kind: input, shape index: {}]
  %s2 = inlined_call_operand.vmem [shape: f32[1,128], index: 2, kind: input, shape index: {}]
  %s3 = inlined_call_operand.vmem [shape: bf16[128,256], index: 3, kind: input, shape index: {}]
  %s4 = inlined_call_operand.vmem [shape: f32[1,256], index: 4, kind: input, shape index: {}]
  %s5 = inlined_call_operand.vmem [shape: f32[1,256], index: 5, kind: input, shape index: {}]
  %s6 = inlined_call_operand.vmem [shape: f32[1,256], index: 6, kind: input, shape index: {}]
  %s7 = inlined_call_operand.vmem [shape: bf16[256,256], index: 7, kind: input, shape index: {}]
  %s8 = inlined_call_operand.vmem [shape: f32[1,256], index: 8, kind: input, shape index: {}]
  %s9 = inlined_call_operand.vmem [shape: f32[1,256], index: 9, kind: input, shape index: {}]
  %s10 = inlined_call_operand.vmem [shape: f32[1,256], index: 10, kind: input, shape index: {}]
  %s11 = inlined_call_operand.vmem [shape: bf16[256,128], index: 11, kind: input, shape index: {}]
  %s12 = inlined_call_operand.vmem [shape: f32[1,128], index: 12, kind: input, shape index: {}]
  %s13 = inlined_call_operand.vmem [shape: f32[8,128], index: 13, kind: output, shape index: {}]
  %s14 = sld [smem:[#allocation0]]
  $region62: #{brain_network_forward.7} parent=0
    _
  %s16 = ssub.s32 1, %s14
  %s17 = scalar_select 0, %s16, %s14
  // Predicated region
  $region2: #{brain_network_forward.7} parent=0 // pred_check
    _
  $region3: #{brain_network_forward.7} parent=0 // pred_check_branch
    %19 = sbr.rel (0) target = $region5
  $region4: #{brain_network_forward.7} parent=0 // pred_region
    _
  $region5: #{brain_network_forward.7} parent=0 // pred_fallthru
    _
  // Predicated region
  $region6: #{brain_network_forward.7} parent=0 // pred_check
    _
  $region7: #{brain_network_forward.7} parent=0 // pred_check_branch
    %21 = sbr.rel (0) target = $region9
  $region8: #{brain_network_forward.7} parent=0 // pred_region
    _
  $region9: #{brain_network_forward.7} parent=0 // pred_fallthru
    _
  // Predicated region
  $region10: #{brain_network_forward.7} parent=0 // pred_check
    _
  $region11: #{brain_network_forward.7} parent=0 // pred_check_branch
    %23 = sbr.rel (0) target = $region13
  $region12: #{brain_network_forward.7} parent=0 // pred_region
    _
  $region13: #{brain_network_forward.7} parent=0 // pred_fallthru
    _
  // Predicated region
  $region14: #{brain_network_forward.7} parent=0 // pred_check
    _
  $region15: #{brain_network_forward.7} parent=0 // pred_check_branch
    %25 = sbr.rel (0) target = $region17
  $region16: #{brain_network_forward.7} parent=0 // pred_region
    _
  $region17: #{brain_network_forward.7} parent=0 // pred_fallthru
    _
  // Predicated region
  $region18: #{brain_network_forward.7} parent=0 // pred_check
    _
  $region19: #{brain_network_forward.7} parent=0 // pred_check_branch
    %27 = sbr.rel (0) target = $region21
  $region20: #{brain_network_forward.7} parent=0 // pred_region
    _
  $region21: #{brain_network_forward.7} parent=0 // pred_fallthru
    _
  // Predicated region
  $region22: #{brain_network_forward.7} parent=0 // pred_check
    _
  $region23: #{brain_network_forward.7} parent=0 // pred_check_branch
    %29 = sbr.rel (0) target = $region25
  $region24: #{brain_network_forward.7} parent=0 // pred_region
    _
  $region25: #{brain_network_forward.7} parent=0 // pred_fallthru
    _
  // Predicated region
  $region26: #{brain_network_forward.7} parent=0 // pred_check
    _
  $region27: #{brain_network_forward.7} parent=0 // pred_check_branch
    %31 = sbr.rel (0) target = $region29
  $region28: #{brain_network_forward.7} parent=0 // pred_region
    _
  $region29: #{brain_network_forward.7} parent=0 // pred_fallthru
    _
  // Predicated region
  $region30: #{brain_network_forward.7} parent=0 // pred_check
    _
  $region31: #{brain_network_forward.7} parent=0 // pred_check_branch
    %33 = sbr.rel (0) target = $region33
  $region32: #{brain_network_forward.7} parent=0 // pred_region
    _
  $region33: #{brain_network_forward.7} parent=0 // pred_fallthru
    _
  // Predicated region
  $region34: #{brain_network_forward.7} parent=0 // pred_check
    _
  $region35: #{brain_network_forward.7} parent=0 // pred_check_branch
    %35 = sbr.rel (0) target = $region37
  $region36: #{brain_network_forward.7} parent=0 // pred_region
    _
  $region37: #{brain_network_forward.7} parent=0 // pred_fallthru
    _
  // Predicated region
  $region38: #{brain_network_forward.7} parent=0 // pred_check
    _
  $region39: #{brain_network_forward.7} parent=0 // pred_check_branch
    %37 = sbr.rel (0) target = $region41
  $region40: #{brain_network_forward.7} parent=0 // pred_region
    _
  $region41: #{brain_network_forward.7} parent=0 // pred_fallthru
    _
  // Predicated region
  $region42: #{brain_network_forward.7} parent=0 // pred_check
    _
  $region43: #{brain_network_forward.7} parent=0 // pred_check_branch
    %39 = sbr.rel (0) target = $region45
  $region44: #{brain_network_forward.7} parent=0 // pred_region
    _
  $region45: #{brain_network_forward.7} parent=0 // pred_fallthru
    _
  // Predicated region
  $region46: #{brain_network_forward.7} parent=0 // pred_check
    _
  $region47: #{brain_network_forward.7} parent=0 // pred_check_branch
    %41 = sbr.rel (0) target = $region49
  $region48: #{brain_network_forward.7} parent=0 // pred_region
    _
  $region49: #{brain_network_forward.7} parent=0 // pred_fallthru
    _
  // Predicated region
  $region50: #{brain_network_forward.7} parent=0 // pred_check
    _
  $region51: #{brain_network_forward.7} parent=0 // pred_check_branch
    %43 = sbr.rel (0) target = $region53
  $region52: #{brain_network_forward.7} parent=0 // pred_region
    _
  $region53: #{brain_network_forward.7} parent=0 // pred_fallthru
    _
  %v45 = vld [vmem:[%s0] sm:$0xff]
  %v46 = vld [vmem:[%s1] sm:$0x1]
  %v47 = vld [vmem:[%s2] sm:$0x1]
  %48 = vadd.xlane.f32.xlu0 %v45
  %v49 = vpop.xlane.xlu0 %48
  %v50 = vrcp.pop 128.0
  %v51 = vmul.f32 %v49, %v50
  %v52 = vsub.f32 %v45, %v51
  %v53 = vmul.f32 %v52, %v52
  %54 = vadd.xlane.f32.xlu0 %v53
  %v55 = vpop.xlane.xlu0 %54
  %v56 = vmul.f32 %v55, %v50
  %v57 = vadd.f32 %v56, 1e-05
  %v58 = vrsqrt.pop %v57
  %v59 = vmul.f32 %v52, %v58
  %v61 = vlaneseq
  %v62 = vshrl.u32 %v61, 7
  %v63 = vsub.s32 0, %v62
  %v64 = vrot.slane %v46, %v63
  %v66 = vmul.f32 %v59, %v64
  %v68 = vlaneseq
  %v69 = vshrl.u32 %v68, 7
  %v70 = vsub.s32 0, %v69
  %v71 = vrot.slane %v47, %v70
  %v73 = vadd.f32 %v66, %v71
  %v74 = vmul.f32 %v73, 0.5
  %v75 = vmul.f32 %v73, 0.70710677
  %v76 = verf.f32.pop %v75
  %v77 = vadd.f32 %v76, 1.0
  %v78 = vmul.f32 %v74, %v77
  %v79 = vld [vmem:[%s3] sm:$0xff]
  %v80 = vld [vmem:[%s3 + $0x8] sm:$0xff]
  %v81 = vld [vmem:[%s3 + $0x10] sm:$0xff]
  %v82 = vld [vmem:[%s3 + $0x18] sm:$0xff]
  %v83 = vld [vmem:[%s3 + $0x20] sm:$0xff]
  %v84 = vld [vmem:[%s3 + $0x28] sm:$0xff]
  %v85 = vld [vmem:[%s3 + $0x30] sm:$0xff]
  %v86 = vld [vmem:[%s3 + $0x38] sm:$0xff]
  %v87 = vld [vmem:[%s3 + $0x40] sm:$0xff]
  %v88 = vld [vmem:[%s3 + $0x48] sm:$0xff]
  %v89 = vld [vmem:[%s3 + $0x50] sm:$0xff]
  %v90 = vld [vmem:[%s3 + $0x58] sm:$0xff]
  %v91 = vld [vmem:[%s3 + $0x60] sm:$0xff]
  %v92 = vld [vmem:[%s3 + $0x68] sm:$0xff]
  %v93 = vld [vmem:[%s3 + $0x70] sm:$0xff]
  %v94 = vld [vmem:[%s3 + $0x78] sm:$0xff]
  %v95 = vpack.c.bf16 %v78, %v78
  %v96 = vld [vmem:[%s4] sm:$0x3]
  %v98 = vlaneseq
  %v99 = vshrl.u32 %v98, 7
  %v100 = vsub.s32 0, %v99
  %v101 = vrot.slane %v96, %v100
  %v102 = vlaneseq
  %v103 = vshrl.u32 %v102, 7
  %v104 = vsub.s32 1, %v103
  %v105 = vrot.slane %v96, %v104
  %v124 = vunpack.c.l.b16 %v79
  %v125 = vunpack.c.h.b16 %v79
  %v126 = vunpack.c.l.b16 %v80
  %v127 = vunpack.c.h.b16 %v80
  %v128 = vunpack.c.l.b16 %v81
  %v129 = vunpack.c.h.b16 %v81
  %v130 = vunpack.c.l.b16 %v82
  %v131 = vunpack.c.h.b16 %v82
  %v132 = vunpack.c.l.b16 %v83
  %v133 = vunpack.c.h.b16 %v83
  %v134 = vunpack.c.l.b16 %v84
  %v135 = vunpack.c.h.b16 %v84
  %v136 = vunpack.c.l.b16 %v85
  %v137 = vunpack.c.h.b16 %v85
  %v138 = vunpack.c.l.b16 %v86
  %v139 = vunpack.c.h.b16 %v86
  %v140 = vunpack.c.l.b16 %v87
  %v141 = vunpack.c.h.b16 %v87
  %v142 = vunpack.c.l.b16 %v88
  %v143 = vunpack.c.h.b16 %v88
  %v144 = vunpack.c.l.b16 %v89
  %v145 = vunpack.c.h.b16 %v89
  %v146 = vunpack.c.l.b16 %v90
  %v147 = vunpack.c.h.b16 %v90
  %v148 = vunpack.c.l.b16 %v91
  %v149 = vunpack.c.h.b16 %v91
  %v150 = vunpack.c.l.b16 %v92
  %v151 = vunpack.c.h.b16 %v92
  %v152 = vunpack.c.l.b16 %v93
  %v153 = vunpack.c.h.b16 %v93
  %v154 = vunpack.c.l.b16 %v94
  %v155 = vunpack.c.h.b16 %v94
  %v156 = vpack.c.b16 %v126, %v124
  %v157 = vpack.c.b16 %v127, %v125
  %v158 = vpack.c.b16 %v130, %v128
  %v159 = vpack.c.b16 %v131, %v129
  %v160 = vpack.c.b16 %v134, %v132
  %v161 = vpack.c.b16 %v135, %v133
  %v162 = vpack.c.b16 %v138, %v136
  %v163 = vpack.c.b16 %v139, %v137
  %v164 = vpack.c.b16 %v142, %v140
  %v165 = vpack.c.b16 %v143, %v141
  %v166 = vpack.c.b16 %v146, %v144
  %v167 = vpack.c.b16 %v147, %v145
  %v168 = vpack.c.b16 %v150, %v148
  %v169 = vpack.c.b16 %v151, %v149
  %v170 = vpack.c.b16 %v154, %v152
  %v171 = vpack.c.b16 %v155, %v153
  %188 = vmatprep.subr.bf16.mxu0 %v157
  %189 = vmatpush1.bf16.msra.mxu0 %v156
  %190 = vmatprep.subr.bf16.mxu0 %v159
  %191 = vmatpush1.bf16.msra.mxu0 %v158
  %192 = vmatprep.subr.bf16.mxu0 %v161
  %193 = vmatpush1.bf16.msra.mxu0 %v160
  %194 = vmatprep.subr.bf16.mxu0 %v163
  %195 = vmatpush1.bf16.msra.mxu0 %v162
  %196 = vmatprep.subr.bf16.mxu0 %v165
  %197 = vmatpush1.bf16.msra.mxu0 %v164
  %198 = vmatprep.subr.bf16.mxu0 %v167
  %199 = vmatpush1.bf16.msra.mxu0 %v166
  %200 = vmatprep.subr.bf16.mxu0 %v169
  %201 = vmatpush1.bf16.msra.mxu0 %v168
  %202 = vmatprep.subr.bf16.mxu0 %v171
  %203 = vmatpush1.bf16.msra.mxu0 %v170
  %204 = vmatprep.subr.bf16.mxu0 0
  %205 = vmatpush1.bf16.msra.mxu0 0
  %206 = vmatprep.subr.bf16.mxu0 0
  %207 = vmatpush1.bf16.msra.mxu0 0
  %208 = vmatprep.subr.bf16.mxu0 0
  %209 = vmatpush1.bf16.msra.mxu0 0
  %210 = vmatprep.subr.bf16.mxu0 0
  %211 = vmatpush1.bf16.msra.mxu0 0
  %212 = vmatprep.subr.bf16.mxu0 0
  %213 = vmatpush1.bf16.msra.mxu0 0
  %214 = vmatprep.subr.bf16.mxu0 0
  %215 = vmatpush1.bf16.msra.mxu0 0
  %216 = vmatprep.subr.bf16.mxu0 0
  %217 = vmatpush1.bf16.msra.mxu0 0
  %218 = vmatprep.subr.bf16.mxu0 0
  %219 = vmatpush1.bf16.msra.mxu0 0
  %220 = vmatprep.mubr.bf16.mxu0 0
  %221 = vmatmul.mubr.bf16.gmra.mrb[0].mxu0 %v95
  %v222 = vpop.f32.mrb[0].mxu0
  %v223 = vadd.f32 %v101, %v222
  %v224 = vpop.f32.mrb[0].mxu0
  %v225 = vadd.f32 %v105, %v224
  %v226 = vpop.f32.mrb[0].mxu0
  %v227 = vpop.f32.mrb[0].mxu0
  %228 = vdwg.mxu0
  %v229 = vld [vmem:[%s5] sm:$0x3]
  %v230 = vld [vmem:[%s6] sm:$0x3]
  %v231 = vadd.f32 %v223, %v225
  %232 = vadd.xlane.f32.xlu0 %v231
  %v233 = vpop.xlane.xlu0 %232
  %v234 = vrcp.pop 256.0
  %v235 = vmul.f32 %v233, %v234
  %v236 = vsub.f32 %v223, %v235
  %v237 = vsub.f32 %v225, %v235
  %v238 = vmul.f32 %v236, %v236
  %v239 = vmul.f32 %v237, %v237
  %v240 = vadd.f32 %v238, %v239
  %241 = vadd.xlane.f32.xlu0 %v240
  %v242 = vpop.xlane.xlu0 %241
  %v243 = vmul.f32 %v242, %v234
  %v244 = vadd.f32 %v243, 1e-05
  %v245 = vrsqrt.pop %v244
  %v246 = vmul.f32 %v236, %v245
  %v247 = vmul.f32 %v237, %v245
  %v249 = vlaneseq
  %v250 = vshrl.u32 %v249, 7
  %v251 = vsub.s32 0, %v250
  %v252 = vrot.slane %v229, %v251
  %v253 = vlaneseq
  %v254 = vshrl.u32 %v253, 7
  %v255 = vsub.s32 1, %v254
  %v256 = vrot.slane %v229, %v255
  %v259 = vmul.f32 %v246, %v252
  %v260 = vmul.f32 %v247, %v256
  %v262 = vlaneseq
  %v263 = vshrl.u32 %v262, 7
  %v264 = vsub.s32 0, %v263
  %v265 = vrot.slane %v230, %v264
  %v266 = vlaneseq
  %v267 = vshrl.u32 %v266, 7
  %v268 = vsub.s32 1, %v267
  %v269 = vrot.slane %v230, %v268
  %v272 = vadd.f32 %v259, %v265
  %v273 = vadd.f32 %v260, %v269
  %v274 = vmul.f32 %v272, 0.5
  %v275 = vmul.f32 %v273, 0.5
  %v276 = vmul.f32 %v272, 0.70710677
  %v277 = vmul.f32 %v273, 0.70710677
  %v278 = verf.f32.pop %v276
  %v279 = verf.f32.pop %v277
  %v280 = vadd.f32 %v278, 1.0
  %v281 = vadd.f32 %v279, 1.0
  %v282 = vmul.f32 %v274, %v280
  %v283 = vmul.f32 %v275, %v281
  %v284 = vld [vmem:[%s7] sm:$0xff]
  %v285 = vld [vmem:[%s7 + $0x8] sm:$0xff]
  %v286 = vld [vmem:[%s7 + $0x10] sm:$0xff]
  %v287 = vld [vmem:[%s7 + $0x18] sm:$0xff]
  %v288 = vld [vmem:[%s7 + $0x20] sm:$0xff]
  %v289 = vld [vmem:[%s7 + $0x28] sm:$0xff]
  %v290 = vld [vmem:[%s7 + $0x30] sm:$0xff]
  %v291 = vld [vmem:[%s7 + $0x38] sm:$0xff]
  %v292 = vld [vmem:[%s7 + $0x40] sm:$0xff]
  %v293 = vld [vmem:[%s7 + $0x48] sm:$0xff]
  %v294 = vld [vmem:[%s7 + $0x50] sm:$0xff]
  %v295 = vld [vmem:[%s7 + $0x58] sm:$0xff]
  %v296 = vld [vmem:[%s7 + $0x60] sm:$0xff]
  %v297 = vld [vmem:[%s7 + $0x68] sm:$0xff]
  %v298 = vld [vmem:[%s7 + $0x70] sm:$0xff]
  %v299 = vld [vmem:[%s7 + $0x78] sm:$0xff]
  %v300 = vld [vmem:[%s7 + $0x80] sm:$0xff]
  %v301 = vld [vmem:[%s7 + $0x88] sm:$0xff]
  %v302 = vld [vmem:[%s7 + $0x90] sm:$0xff]
  %v303 = vld [vmem:[%s7 + $0x98] sm:$0xff]
  %v304 = vld [vmem:[%s7 + $0xa0] sm:$0xff]
  %v305 = vld [vmem:[%s7 + $0xa8] sm:$0xff]
  %v306 = vld [vmem:[%s7 + $0xb0] sm:$0xff]
  %v307 = vld [vmem:[%s7 + $0xb8] sm:$0xff]
  %v308 = vld [vmem:[%s7 + $0xc0] sm:$0xff]
  %v309 = vld [vmem:[%s7 + $0xc8] sm:$0xff]
  %v310 = vld [vmem:[%s7 + $0xd0] sm:$0xff]
  %v311 = vld [vmem:[%s7 + $0xd8] sm:$0xff]
  %v312 = vld [vmem:[%s7 + $0xe0] sm:$0xff]
  %v313 = vld [vmem:[%s7 + $0xe8] sm:$0xff]
  %v314 = vld [vmem:[%s7 + $0xf0] sm:$0xff]
  %v315 = vld [vmem:[%s7 + $0xf8] sm:$0xff]
  %v316 = vpack.c.bf16 %v282, %v282
  %v317 = vpack.c.bf16 %v283, %v283
  %v318 = vld [vmem:[%s8] sm:$0x3]
  %v320 = vlaneseq
  %v321 = vshrl.u32 %v320, 7
  %v322 = vsub.s32 0, %v321
  %v323 = vrot.slane %v318, %v322
  %v324 = vlaneseq
  %v325 = vshrl.u32 %v324, 7
  %v326 = vsub.s32 1, %v325
  %v327 = vrot.slane %v318, %v326
  %v362 = vunpack.c.l.b16 %v284
  %v363 = vunpack.c.h.b16 %v284
  %v364 = vunpack.c.l.b16 %v285
  %v365 = vunpack.c.h.b16 %v285
  %v366 = vunpack.c.l.b16 %v286
  %v367 = vunpack.c.h.b16 %v286
  %v368 = vunpack.c.l.b16 %v287
  %v369 = vunpack.c.h.b16 %v287
  %v370 = vunpack.c.l.b16 %v288
  %v371 = vunpack.c.h.b16 %v288
  %v372 = vunpack.c.l.b16 %v289
  %v373 = vunpack.c.h.b16 %v289
  %v374 = vunpack.c.l.b16 %v290
  %v375 = vunpack.c.h.b16 %v290
  %v376 = vunpack.c.l.b16 %v291
  %v377 = vunpack.c.h.b16 %v291
  %v378 = vunpack.c.l.b16 %v292
  %v379 = vunpack.c.h.b16 %v292
  %v380 = vunpack.c.l.b16 %v293
  %v381 = vunpack.c.h.b16 %v293
  %v382 = vunpack.c.l.b16 %v294
  %v383 = vunpack.c.h.b16 %v294
  %v384 = vunpack.c.l.b16 %v295
  %v385 = vunpack.c.h.b16 %v295
  %v386 = vunpack.c.l.b16 %v296
  %v387 = vunpack.c.h.b16 %v296
  %v388 = vunpack.c.l.b16 %v297
  %v389 = vunpack.c.h.b16 %v297
  %v390 = vunpack.c.l.b16 %v298
  %v391 = vunpack.c.h.b16 %v298
  %v392 = vunpack.c.l.b16 %v299
  %v393 = vunpack.c.h.b16 %v299
  %v394 = vunpack.c.l.b16 %v300
  %v395 = vunpack.c.h.b16 %v300
  %v396 = vunpack.c.l.b16 %v301
  %v397 = vunpack.c.h.b16 %v301
  %v398 = vunpack.c.l.b16 %v302
  %v399 = vunpack.c.h.b16 %v302
  %v400 = vunpack.c.l.b16 %v303
  %v401 = vunpack.c.h.b16 %v303
  %v402 = vunpack.c.l.b16 %v304
  %v403 = vunpack.c.h.b16 %v304
  %v404 = vunpack.c.l.b16 %v305
  %v405 = vunpack.c.h.b16 %v305
  %v406 = vunpack.c.l.b16 %v306
  %v407 = vunpack.c.h.b16 %v306
  %v408 = vunpack.c.l.b16 %v307
  %v409 = vunpack.c.h.b16 %v307
  %v410 = vunpack.c.l.b16 %v308
  %v411 = vunpack.c.h.b16 %v308
  %v412 = vunpack.c.l.b16 %v309
  %v413 = vunpack.c.h.b16 %v309
  %v414 = vunpack.c.l.b16 %v310
  %v415 = vunpack.c.h.b16 %v310
  %v416 = vunpack.c.l.b16 %v311
  %v417 = vunpack.c.h.b16 %v311
  %v418 = vunpack.c.l.b16 %v312
  %v419 = vunpack.c.h.b16 %v312
  %v420 = vunpack.c.l.b16 %v313
  %v421 = vunpack.c.h.b16 %v313
  %v422 = vunpack.c.l.b16 %v314
  %v423 = vunpack.c.h.b16 %v314
  %v424 = vunpack.c.l.b16 %v315
  %v425 = vunpack.c.h.b16 %v315
  %v426 = vpack.c.b16 %v364, %v362
  %v427 = vpack.c.b16 %v365, %v363
  %v428 = vpack.c.b16 %v368, %v366
  %v429 = vpack.c.b16 %v369, %v367
  %v430 = vpack.c.b16 %v372, %v370
  %v431 = vpack.c.b16 %v373, %v371
  %v432 = vpack.c.b16 %v376, %v374
  %v433 = vpack.c.b16 %v377, %v375
  %v434 = vpack.c.b16 %v380, %v378
  %v435 = vpack.c.b16 %v381, %v379
  %v436 = vpack.c.b16 %v384, %v382
  %v437 = vpack.c.b16 %v385, %v383
  %v438 = vpack.c.b16 %v388, %v386
  %v439 = vpack.c.b16 %v389, %v387
  %v440 = vpack.c.b16 %v392, %v390
  %v441 = vpack.c.b16 %v393, %v391
  %v442 = vpack.c.b16 %v396, %v394
  %v443 = vpack.c.b16 %v397, %v395
  %v444 = vpack.c.b16 %v400, %v398
  %v445 = vpack.c.b16 %v401, %v399
  %v446 = vpack.c.b16 %v404, %v402
  %v447 = vpack.c.b16 %v405, %v403
  %v448 = vpack.c.b16 %v408, %v406
  %v449 = vpack.c.b16 %v409, %v407
  %v450 = vpack.c.b16 %v412, %v410
  %v451 = vpack.c.b16 %v413, %v411
  %v452 = vpack.c.b16 %v416, %v414
  %v453 = vpack.c.b16 %v417, %v415
  %v454 = vpack.c.b16 %v420, %v418
  %v455 = vpack.c.b16 %v421, %v419
  %v456 = vpack.c.b16 %v424, %v422
  %v457 = vpack.c.b16 %v425, %v423
  %490 = vmatprep.subr.bf16.mxu0 %v427
  %491 = vmatpush1.bf16.msra.mxu0 %v426
  %492 = vmatprep.subr.bf16.mxu0 %v429
  %493 = vmatpush1.bf16.msra.mxu0 %v428
  %494 = vmatprep.subr.bf16.mxu0 %v431
  %495 = vmatpush1.bf16.msra.mxu0 %v430
  %496 = vmatprep.subr.bf16.mxu0 %v433
  %497 = vmatpush1.bf16.msra.mxu0 %v432
  %498 = vmatprep.subr.bf16.mxu0 %v435
  %499 = vmatpush1.bf16.msra.mxu0 %v434
  %500 = vmatprep.subr.bf16.mxu0 %v437
  %501 = vmatpush1.bf16.msra.mxu0 %v436
  %502 = vmatprep.subr.bf16.mxu0 %v439
  %503 = vmatpush1.bf16.msra.mxu0 %v438
  %504 = vmatprep.subr.bf16.mxu0 %v441
  %505 = vmatpush1.bf16.msra.mxu0 %v440
  %506 = vmatprep.subr.bf16.mxu0 %v443
  %507 = vmatpush1.bf16.msra.mxu0 %v442
  %508 = vmatprep.subr.bf16.mxu0 %v445
  %509 = vmatpush1.bf16.msra.mxu0 %v444
  %510 = vmatprep.subr.bf16.mxu0 %v447
  %511 = vmatpush1.bf16.msra.mxu0 %v446
  %512 = vmatprep.subr.bf16.mxu0 %v449
  %513 = vmatpush1.bf16.msra.mxu0 %v448
  %514 = vmatprep.subr.bf16.mxu0 %v451
  %515 = vmatpush1.bf16.msra.mxu0 %v450
  %516 = vmatprep.subr.bf16.mxu0 %v453
  %517 = vmatpush1.bf16.msra.mxu0 %v452
  %518 = vmatprep.subr.bf16.mxu0 %v455
  %519 = vmatpush1.bf16.msra.mxu0 %v454
  %520 = vmatprep.subr.bf16.mxu0 %v457
  %521 = vmatpush1.bf16.msra.mxu0 %v456
  %522 = vmatprep.mubr.bf16.mxu0 %v317
  %523 = vmatmul.mubr.bf16.gmra.mrb[0].mxu0 %v316
  %v524 = vpop.f32.mrb[0].mxu0
  %v525 = vadd.f32 %v323, %v524
  %v526 = vpop.f32.mrb[0].mxu0
  %v527 = vadd.f32 %v327, %v526
  %v528 = vpop.f32.mrb[0].mxu0
  %v529 = vpop.f32.mrb[0].mxu0
  %530 = vdwg.mxu0
  %v531 = vld [vmem:[%s9] sm:$0x3]
  %v532 = vld [vmem:[%s10] sm:$0x3]
  %v533 = vadd.f32 %v525, %v527
  %534 = vadd.xlane.f32.xlu0 %v533
  %v535 = vpop.xlane.xlu0 %534
  %v536 = vmul.f32 %v535, %v234
  %v537 = vsub.f32 %v525, %v536
  %v538 = vsub.f32 %v527, %v536
  %v539 = vmul.f32 %v537, %v537
  %v540 = vmul.f32 %v538, %v538
  %v541 = vadd.f32 %v539, %v540
  %542 = vadd.xlane.f32.xlu0 %v541
  %v543 = vpop.xlane.xlu0 %542
  %v544 = vmul.f32 %v543, %v234
  %v545 = vadd.f32 %v544, 1e-05
  %v546 = vrsqrt.pop %v545
  %v547 = vmul.f32 %v537, %v546
  %v548 = vmul.f32 %v538, %v546
  %v550 = vlaneseq
  %v551 = vshrl.u32 %v550, 7
  %v552 = vsub.s32 0, %v551
  %v553 = vrot.slane %v531, %v552
  %v554 = vlaneseq
  %v555 = vshrl.u32 %v554, 7
  %v556 = vsub.s32 1, %v555
  %v557 = vrot.slane %v531, %v556
  %v560 = vmul.f32 %v547, %v553
  %v561 = vmul.f32 %v548, %v557
  %v563 = vlaneseq
  %v564 = vshrl.u32 %v563, 7
  %v565 = vsub.s32 0, %v564
  %v566 = vrot.slane %v532, %v565
  %v567 = vlaneseq
  %v568 = vshrl.u32 %v567, 7
  %v569 = vsub.s32 1, %v568
  %v570 = vrot.slane %v532, %v569
  %v573 = vadd.f32 %v560, %v566
  %v574 = vadd.f32 %v561, %v570
  %v575 = vmul.f32 %v573, 0.5
  %v576 = vmul.f32 %v574, 0.5
  %v577 = vmul.f32 %v573, 0.70710677
  %v578 = vmul.f32 %v574, 0.70710677
  %v579 = verf.f32.pop %v577
  %v580 = verf.f32.pop %v578
  %v581 = vadd.f32 %v579, 1.0
  %v582 = vadd.f32 %v580, 1.0
  %v583 = vmul.f32 %v575, %v581
  %v584 = vmul.f32 %v576, %v582
  %v585 = vld [vmem:[%s11] sm:$0xf]
  %v586 = vld [vmem:[%s11 + $0x4] sm:$0xf]
  %v587 = vld [vmem:[%s11 + $0x8] sm:$0xf]
  %v588 = vld [vmem:[%s11 + $0xc] sm:$0xf]
  %v589 = vld [vmem:[%s11 + $0x10] sm:$0xf]
  %v590 = vld [vmem:[%s11 + $0x14] sm:$0xf]
  %v591 = vld [vmem:[%s11 + $0x18] sm:$0xf]
  %v592 = vld [vmem:[%s11 + $0x1c] sm:$0xf]
  %v593 = vld [vmem:[%s11 + $0x20] sm:$0xf]
  %v594 = vld [vmem:[%s11 + $0x24] sm:$0xf]
  %v595 = vld [vmem:[%s11 + $0x28] sm:$0xf]
  %v596 = vld [vmem:[%s11 + $0x2c] sm:$0xf]
  %v597 = vld [vmem:[%s11 + $0x30] sm:$0xf]
  %v598 = vld [vmem:[%s11 + $0x34] sm:$0xf]
  %v599 = vld [vmem:[%s11 + $0x38] sm:$0xf]
  %v600 = vld [vmem:[%s11 + $0x3c] sm:$0xf]
  %v601 = vld [vmem:[%s11 + $0x40] sm:$0xf]
  %v602 = vld [vmem:[%s11 + $0x44] sm:$0xf]
  %v603 = vld [vmem:[%s11 + $0x48] sm:$0xf]
  %v604 = vld [vmem:[%s11 + $0x4c] sm:$0xf]
  %v605 = vld [vmem:[%s11 + $0x50] sm:$0xf]
  %v606 = vld [vmem:[%s11 + $0x54] sm:$0xf]
  %v607 = vld [vmem:[%s11 + $0x58] sm:$0xf]
  %v608 = vld [vmem:[%s11 + $0x5c] sm:$0xf]
  %v609 = vld [vmem:[%s11 + $0x60] sm:$0xf]
  %v610 = vld [vmem:[%s11 + $0x64] sm:$0xf]
  %v611 = vld [vmem:[%s11 + $0x68] sm:$0xf]
  %v612 = vld [vmem:[%s11 + $0x6c] sm:$0xf]
  %v613 = vld [vmem:[%s11 + $0x70] sm:$0xf]
  %v614 = vld [vmem:[%s11 + $0x74] sm:$0xf]
  %v615 = vld [vmem:[%s11 + $0x78] sm:$0xf]
  %v616 = vld [vmem:[%s11 + $0x7c] sm:$0xf]
  %v617 = vpack.c.bf16 %v583, %v583
  %v618 = vpack.c.bf16 %v584, %v584
  %v619 = vld [vmem:[%s12] sm:$0x1]
  %v621 = vlaneseq
  %v622 = vshrl.u32 %v621, 7
  %v623 = vsub.s32 0, %v622
  %v624 = vrot.slane %v619, %v623
  %v658 = vunpack.c.l.b16 %v585
  %v659 = vunpack.c.l.b16 %v586
  %v660 = vunpack.c.l.b16 %v587
  %v661 = vunpack.c.l.b16 %v588
  %v662 = vunpack.c.l.b16 %v589
  %v663 = vunpack.c.l.b16 %v590
  %v664 = vunpack.c.l.b16 %v591
  %v665 = vunpack.c.l.b16 %v592
  %v666 = vunpack.c.l.b16 %v593
  %v667 = vunpack.c.l.b16 %v594
  %v668 = vunpack.c.l.b16 %v595
  %v669 = vunpack.c.l.b16 %v596
  %v670 = vunpack.c.l.b16 %v597
  %v671 = vunpack.c.l.b16 %v598
  %v672 = vunpack.c.l.b16 %v599
  %v673 = vunpack.c.l.b16 %v600
  %v674 = vunpack.c.l.b16 %v601
  %v675 = vunpack.c.l.b16 %v602
  %v676 = vunpack.c.l.b16 %v603
  %v677 = vunpack.c.l.b16 %v604
  %v678 = vunpack.c.l.b16 %v605
  %v679 = vunpack.c.l.b16 %v606
  %v680 = vunpack.c.l.b16 %v607
  %v681 = vunpack.c.l.b16 %v608
  %v682 = vunpack.c.l.b16 %v609
  %v683 = vunpack.c.l.b16 %v610
  %v684 = vunpack.c.l.b16 %v611
  %v685 = vunpack.c.l.b16 %v612
  %v686 = vunpack.c.l.b16 %v613
  %v687 = vunpack.c.l.b16 %v614
  %v688 = vunpack.c.l.b16 %v615
  %v689 = vunpack.c.l.b16 %v616
  %v690 = vpack.c.b16 %v659, %v658
  %v691 = vpack.c.b16 %v661, %v660
  %v692 = vpack.c.b16 %v663, %v662
  %v693 = vpack.c.b16 %v665, %v664
  %v694 = vpack.c.b16 %v667, %v666
  %v695 = vpack.c.b16 %v669, %v668
  %v696 = vpack.c.b16 %v671, %v670
  %v697 = vpack.c.b16 %v673, %v672
  %v698 = vpack.c.b16 %v675, %v674
  %v699 = vpack.c.b16 %v677, %v676
  %v700 = vpack.c.b16 %v679, %v678
  %v701 = vpack.c.b16 %v681, %v680
  %v702 = vpack.c.b16 %v683, %v682
  %v703 = vpack.c.b16 %v685, %v684
  %v704 = vpack.c.b16 %v687, %v686
  %v705 = vpack.c.b16 %v689, %v688
  %722 = vmatprep.subr.bf16.mxu0 0
  %723 = vmatpush1.bf16.msra.mxu0 %v690
  %724 = vmatprep.subr.bf16.mxu0 0
  %725 = vmatpush1.bf16.msra.mxu0 %v691
  %726 = vmatprep.subr.bf16.mxu0 0
  %727 = vmatpush1.bf16.msra.mxu0 %v692
  %728 = vmatprep.subr.bf16.mxu0 0
  %729 = vmatpush1.bf16.msra.mxu0 %v693
  %730 = vmatprep.subr.bf16.mxu0 0
  %731 = vmatpush1.bf16.msra.mxu0 %v694
  %732 = vmatprep.subr.bf16.mxu0 0
  %733 = vmatpush1.bf16.msra.mxu0 %v695
  %734 = vmatprep.subr.bf16.mxu0 0
  %735 = vmatpush1.bf16.msra.mxu0 %v696
  %736 = vmatprep.subr.bf16.mxu0 0
  %737 = vmatpush1.bf16.msra.mxu0 %v697
  %738 = vmatprep.subr.bf16.mxu0 0
  %739 = vmatpush1.bf16.msra.mxu0 %v698
  %740 = vmatprep.subr.bf16.mxu0 0
  %741 = vmatpush1.bf16.msra.mxu0 %v699
  %742 = vmatprep.subr.bf16.mxu0 0
  %743 = vmatpush1.bf16.msra.mxu0 %v700
  %744 = vmatprep.subr.bf16.mxu0 0
  %745 = vmatpush1.bf16.msra.mxu0 %v701
  %746 = vmatprep.subr.bf16.mxu0 0
  %747 = vmatpush1.bf16.msra.mxu0 %v702
  %748 = vmatprep.subr.bf16.mxu0 0
  %749 = vmatpush1.bf16.msra.mxu0 %v703
  %750 = vmatprep.subr.bf16.mxu0 0
  %751 = vmatpush1.bf16.msra.mxu0 %v704
  %752 = vmatprep.subr.bf16.mxu0 0
  %753 = vmatpush1.bf16.msra.mxu0 %v705
  %754 = vmatprep.mubr.bf16.mxu0 %v618
  %755 = vmatmul.mubr.bf16.gmra.mrb[0].mxu0 %v617
  %v756 = vpop.f32.mrb[0].mxu0
  %v757 = vadd.f32 %v624, %v756
  %v758 = vpop.f32.mrb[0].mxu0
  %v759 = vpop.f32.mrb[0].mxu0
  %v760 = vpop.f32.mrb[0].mxu0
  %761 = vdwg.mxu0
  %762 = vst [vmem:[%s13] sm:$0xff] %v757
  // Predicated region
  $region54: #{brain_network_forward.7} parent=0 // pred_check
    _
  $region55: #{brain_network_forward.7} parent=0 // pred_check_branch
    %764 = sbr.rel (0) target = $region57
  $region56: #{brain_network_forward.7} parent=0 // pred_region
    _
  $region57: #{brain_network_forward.7} parent=0 // pred_fallthru
    _
  // Predicated region
  $region58: #{brain_network_forward.7} parent=0 // pred_check
    _
  $region59: #{brain_network_forward.7} parent=0 // pred_check_branch
    %766 = sbr.rel (0) target = $region61
  $region60: #{brain_network_forward.7} parent=0 // pred_region
    _
  $region61: #{brain_network_forward.7} parent=0 // pred_fallthru
    _

</llo_original>
